<compile_context>
chip_gen: v5e
topology: v5e:2x2
jax: 0.10.0
libtpu: 0.0.40
codegen_flags: <defaults>
</compile_context>

<pallas_src>
import jax
import jax.numpy as jnp
from jax.experimental import pallas as pl
from jax.experimental.pallas import tpu as pltpu

DIMS = [28 * 28, 128, 64, 12, 6, 12, 64, 128, 28 * 28]
N_LAYERS = len(DIMS) - 1
# activation applied AFTER each linear layer: 'relu', None, or 'sigmoid'
ACTS = ["relu", "relu", "relu", None, "relu", "relu", "relu", "sigmoid"]


def _round_up(x, m):
    return (x + m - 1) // m * m


# Lane-padded dims. First/last stay at 784 (full-extent blocks, no dead lanes);
# hidden dims pad to 128: [784, 128, 128, 128, 128, 128, 128, 128, 784].
PAD_DIMS = [DIMS[0]] + [_round_up(d, 128) for d in DIMS[1:-1]] + [DIMS[-1]]


def autoencoder_kernel(x_ref, *refs):
    """refs = (w0, b0, w1, b1, ..., w7, b7, out_ref).

    x_ref:  (TB, 784) bf16 batch tile
    w_i:    (PAD_DIMS[i], PAD_DIMS[i+1]) bf16, VMEM-resident across grid steps
    b_i:    (1, PAD_DIMS[i+1]) f32
    out_ref:(TB, 784) f32 (or bf16 if requested)
    """
    out_ref = refs[-1]
    params = refs[:-1]

    h = x_ref[...]                                   # bf16, no upcast
    for li in range(N_LAYERS):
        w = params[2 * li][...]                      # bf16 (din_p, dout_p)
        b = params[2 * li + 1][...]                  # f32  (1, dout_p)
        hb = h if h.dtype == jnp.bfloat16 else h.astype(jnp.bfloat16)
        # bf16 x bf16 -> f32 accumulate on the MXU.
        h = jnp.dot(hb, w, preferred_element_type=jnp.float32) + b
        act = ACTS[li]
        if act == "relu":
            h = jnp.maximum(h, 0.0)
        elif act == "sigmoid":
            # sigmoid(x) = 1 / (1 + exp(-x)); exp + approx reciprocal on EUP.
            h = pl.reciprocal(1.0 + jnp.exp(-h), approx=True)
    out_ref[...] = h.astype(out_ref.dtype)


def prepare_params(params):
    """Pad (W, b) to lane-aligned shapes; weights -> bf16, biases stay f32."""
    flat = []
    for li, (w, b) in enumerate(params):
        din, dout = DIMS[li], DIMS[li + 1]
        dpi, dpo = PAD_DIMS[li], PAD_DIMS[li + 1]
        wp = w.astype(jnp.bfloat16)
        if (dpi, dpo) != (din, dout):
            wp = jnp.zeros((dpi, dpo), jnp.bfloat16).at[:din, :dout].set(wp)
        bp = b.reshape(1, dout).astype(jnp.float32)
        if dpo != dout:
            bp = jnp.zeros((1, dpo), jnp.float32).at[:, :dout].set(bp)
        flat.extend([wp, bp])
    return flat


def autoencoder_forward(x, params, *, block_batch=1024, out_dtype=jnp.float32):
    """x: (B, 784) float array.  params: list of 8 (W (din,dout), b (1,dout)).

    block_batch: rows per grid step (rounded to a multiple of 16).  Default
    1024 fits v5e/v6e/v7x with the 48 MiB vmem limit below; use out_dtype=
    jnp.bfloat16 before pushing to 2048 (halves the dominant output buffers).
    """
    B, din = x.shape
    assert din == DIMS[0]

    TB = max(16, _round_up(min(block_batch, _round_up(B, 16)), 16))
    # Ensure >= 2 grid steps when the batch allows it (feeds both TCs on v7x).
    if TB >= B and B > 16:
        TB = _round_up((B + 1) // 2, 16)
    Bp = _round_up(B, TB)

    # Single fused cast (+ batch pad only if B isn't a tile multiple).
    xb = x.astype(jnp.bfloat16)
    if Bp != B:
        xb = jnp.zeros((Bp, din), jnp.bfloat16).at[:B].set(xb)

    flat_params = prepare_params(params)

    # Batch tile streams; every weight/bias block has a constant index map so
    # it is DMA'd once and stays resident across all grid steps.
    in_specs = [pl.BlockSpec((TB, din), lambda i: (i, 0))]
    for li in range(N_LAYERS):
        dpi, dpo = PAD_DIMS[li], PAD_DIMS[li + 1]
        in_specs.append(pl.BlockSpec((dpi, dpo), lambda i: (0, 0)))
        in_specs.append(pl.BlockSpec((1, dpo), lambda i: (0, 0)))
    out_spec = pl.BlockSpec((TB, DIMS[-1]), lambda i: (i, 0))

    out = pl.pallas_call(
        autoencoder_kernel,
        out_shape=jax.ShapeDtypeStruct((Bp, DIMS[-1]), out_dtype),
        grid=(Bp // TB,),
        in_specs=in_specs,
        out_specs=out_spec,
        compiler_params=pltpu.CompilerParams(
            # Batch tiles are independent -> shard across TCs on v7x megacore.
            dimension_semantics=("parallel",),
            # Above v5e's 16 MiB scoped default, under v7x's 64 MiB physical.
            vmem_limit_bytes=48 << 20,
        ),
    )(xb, *flat_params)

    if Bp != B:
        out = out[:B]
    return out


def init_params(key):
    """Deterministic init mimicking torch.nn.Linear default (uniform +-1/sqrt(fan_in))."""
    params = []
    for li in range(N_LAYERS):
        din, dout = DIMS[li], DIMS[li + 1]
        key, kw, kb = jax.random.split(key, 3)
        bound = 1.0 / (din ** 0.5)
        w = jax.random.uniform(kw, (din, dout), jnp.float32, -bound, bound)
        b = jax.random.uniform(kb, (1, dout), jnp.float32, -bound, bound)
        params.append((w, b))
    return params


def reference_forward(x, params):
    """Pure-JAX reference mirroring the kernel's bf16-weight / f32-accum math."""
    h = x
    for li, (w, b) in enumerate(params):
        h = jnp.dot(h.astype(jnp.bfloat16), w.astype(jnp.bfloat16),
                    preferred_element_type=jnp.float32) + b
        if ACTS[li] == "relu":
            h = jnp.maximum(h, 0.0)
        elif ACTS[li] == "sigmoid":
            h = jax.nn.sigmoid(h)
    return h


if __name__ == "__main__":
    key = jax.random.PRNGKey(0)
    key, kx = jax.random.split(key)
    B = 64
    x = jax.random.uniform(kx, (B, 28 * 28), jnp.float32)  # MNIST-like in [0,1]

    params = init_params(key)

    # block_batch=32 -> grid=(2,): exercises the batch-tiled pipeline at small B.
    out = autoencoder_forward(x, params, block_batch=32)
    out = jax.block_until_ready(out)

    ref = reference_forward(x, params)
    assert out.shape == (B, 28 * 28)
    max_err = float(jnp.max(jnp.abs(out - ref)))
    assert jnp.allclose(out, ref, atol=5e-3, rtol=0.0), \
        f"mismatch vs reference, max_err={max_err}"

    print("KERNEL_OK")
</pallas_src>

<mosaic_0001>
module attributes {stable_mosaic.version = 11 : i64} {
  func.func @autoencoder_kernel(%arg0: i32, %arg1: memref<32x784xbf16, #tpu.memory_space<vmem>>, %arg2: memref<784x128xbf16, #tpu.memory_space<vmem>>, %arg3: memref<1x128xf32, #tpu.memory_space<vmem>>, %arg4: memref<128x128xbf16, #tpu.memory_space<vmem>>, %arg5: memref<1x128xf32, #tpu.memory_space<vmem>>, %arg6: memref<128x128xbf16, #tpu.memory_space<vmem>>, %arg7: memref<1x128xf32, #tpu.memory_space<vmem>>, %arg8: memref<128x128xbf16, #tpu.memory_space<vmem>>, %arg9: memref<1x128xf32, #tpu.memory_space<vmem>>, %arg10: memref<128x128xbf16, #tpu.memory_space<vmem>>, %arg11: memref<1x128xf32, #tpu.memory_space<vmem>>, %arg12: memref<128x128xbf16, #tpu.memory_space<vmem>>, %arg13: memref<1x128xf32, #tpu.memory_space<vmem>>, %arg14: memref<128x128xbf16, #tpu.memory_space<vmem>>, %arg15: memref<1x128xf32, #tpu.memory_space<vmem>>, %arg16: memref<128x784xbf16, #tpu.memory_space<vmem>>, %arg17: memref<1x784xf32, #tpu.memory_space<vmem>>, %arg18: memref<32x784xf32, #tpu.memory_space<vmem>>) attributes {dimension_semantics = [#tpu.dimension_semantics<parallel>], iteration_bounds = array<i64: 2>, scalar_prefetch = 0 : i64, scratch_operands = 0 : i64, tpu.core_type = #tpu.core_type<tc>, window_params = [{transform_indices = @transform_0, window_bounds = array<i64: 32, 784>}, {pipeline_mode = #tpu.pipeline_mode<synchronous>, transform_indices = @transform_1, window_bounds = array<i64: 784, 128>}, {pipeline_mode = #tpu.pipeline_mode<synchronous>, transform_indices = @transform_2, window_bounds = array<i64: 1, 128>}, {pipeline_mode = #tpu.pipeline_mode<synchronous>, transform_indices = @transform_3, window_bounds = array<i64: 128, 128>}, {pipeline_mode = #tpu.pipeline_mode<synchronous>, transform_indices = @transform_4, window_bounds = array<i64: 1, 128>}, {pipeline_mode = #tpu.pipeline_mode<synchronous>, transform_indices = @transform_5, window_bounds = array<i64: 128, 128>}, {pipeline_mode = #tpu.pipeline_mode<synchronous>, transform_indices = @transform_6, window_bounds = array<i64: 1, 128>}, {pipeline_mode = #tpu.pipeline_mode<synchronous>, transform_indices = @transform_7, window_bounds = array<i64: 128, 128>}, {pipeline_mode = #tpu.pipeline_mode<synchronous>, transform_indices = @transform_8, window_bounds = array<i64: 1, 128>}, {pipeline_mode = #tpu.pipeline_mode<synchronous>, transform_indices = @transform_9, window_bounds = array<i64: 128, 128>}, {pipeline_mode = #tpu.pipeline_mode<synchronous>, transform_indices = @transform_10, window_bounds = array<i64: 1, 128>}, {pipeline_mode = #tpu.pipeline_mode<synchronous>, transform_indices = @transform_11, window_bounds = array<i64: 128, 128>}, {pipeline_mode = #tpu.pipeline_mode<synchronous>, transform_indices = @transform_12, window_bounds = array<i64: 1, 128>}, {pipeline_mode = #tpu.pipeline_mode<synchronous>, transform_indices = @transform_13, window_bounds = array<i64: 128, 128>}, {pipeline_mode = #tpu.pipeline_mode<synchronous>, transform_indices = @transform_14, window_bounds = array<i64: 1, 128>}, {pipeline_mode = #tpu.pipeline_mode<synchronous>, transform_indices = @transform_15, window_bounds = array<i64: 128, 784>}, {pipeline_mode = #tpu.pipeline_mode<synchronous>, transform_indices = @transform_16, window_bounds = array<i64: 1, 784>}, {transform_indices = @transform_17, window_bounds = array<i64: 32, 784>}]} {
    %c0 = arith.constant 0 : index
    %c0_0 = arith.constant 0 : index
    %0 = vector.load %arg1[%c0, %c0_0] : memref<32x784xbf16, #tpu.memory_space<vmem>>, vector<32x784xbf16>
    %c0_1 = arith.constant 0 : index
    %c0_2 = arith.constant 0 : index
    %1 = vector.load %arg2[%c0_1, %c0_2] : memref<784x128xbf16, #tpu.memory_space<vmem>>, vector<784x128xbf16>
    %c0_3 = arith.constant 0 : index
    %c0_4 = arith.constant 0 : index
    %2 = vector.load %arg3[%c0_3, %c0_4] : memref<1x128xf32, #tpu.memory_space<vmem>>, vector<1x128xf32>
    %cst = arith.constant dense<0.000000e+00> : vector<32x128xf32>
    %3 = tpu.matmul %0, %1, %cst {dimension_numbers = #tpu.dot_dimension_numbers<[1], [0], [0], [1], [0, 0, 1, 1], [], []>} : vector<32x784xbf16>, vector<784x128xbf16>, vector<32x128xf32> -> vector<32x128xf32>
    %4 = vector.broadcast %2 : vector<1x128xf32> to vector<32x128xf32>
    %5 = arith.addf %3, %4 : vector<32x128xf32>
    %cst_5 = arith.constant 0.000000e+00 : f32
    %6 = vector.broadcast %cst_5 : f32 to vector<32x128xf32>
    %7 = arith.maximumf %5, %6 : vector<32x128xf32>
    %c0_6 = arith.constant 0 : index
    %c0_7 = arith.constant 0 : index
    %8 = vector.load %arg4[%c0_6, %c0_7] : memref<128x128xbf16, #tpu.memory_space<vmem>>, vector<128x128xbf16>
    %c0_8 = arith.constant 0 : index
    %c0_9 = arith.constant 0 : index
    %9 = vector.load %arg5[%c0_8, %c0_9] : memref<1x128xf32, #tpu.memory_space<vmem>>, vector<1x128xf32>
    %10 = arith.truncf %7 : vector<32x128xf32> to vector<32x128xbf16>
    %cst_10 = arith.constant dense<0.000000e+00> : vector<32x128xf32>
    %11 = tpu.matmul %10, %8, %cst_10 {dimension_numbers = #tpu.dot_dimension_numbers<[1], [0], [0], [1], [0, 0, 1, 1], [], []>} : vector<32x128xbf16>, vector<128x128xbf16>, vector<32x128xf32> -> vector<32x128xf32>
    %12 = vector.broadcast %9 : vector<1x128xf32> to vector<32x128xf32>
    %13 = arith.addf %11, %12 : vector<32x128xf32>
    %cst_11 = arith.constant 0.000000e+00 : f32
    %14 = vector.broadcast %cst_11 : f32 to vector<32x128xf32>
    %15 = arith.maximumf %13, %14 : vector<32x128xf32>
    %c0_12 = arith.constant 0 : index
    %c0_13 = arith.constant 0 : index
    %16 = vector.load %arg6[%c0_12, %c0_13] : memref<128x128xbf16, #tpu.memory_space<vmem>>, vector<128x128xbf16>
    %c0_14 = arith.constant 0 : index
    %c0_15 = arith.constant 0 : index
    %17 = vector.load %arg7[%c0_14, %c0_15] : memref<1x128xf32, #tpu.memory_space<vmem>>, vector<1x128xf32>
    %18 = arith.truncf %15 : vector<32x128xf32> to vector<32x128xbf16>
    %cst_16 = arith.constant dense<0.000000e+00> : vector<32x128xf32>
    %19 = tpu.matmul %18, %16, %cst_16 {dimension_numbers = #tpu.dot_dimension_numbers<[1], [0], [0], [1], [0, 0, 1, 1], [], []>} : vector<32x128xbf16>, vector<128x128xbf16>, vector<32x128xf32> -> vector<32x128xf32>
    %20 = vector.broadcast %17 : vector<1x128xf32> to vector<32x128xf32>
    %21 = arith.addf %19, %20 : vector<32x128xf32>
    %cst_17 = arith.constant 0.000000e+00 : f32
    %22 = vector.broadcast %cst_17 : f32 to vector<32x128xf32>
    %23 = arith.maximumf %21, %22 : vector<32x128xf32>
    %c0_18 = arith.constant 0 : index
    %c0_19 = arith.constant 0 : index
    %24 = vector.load %arg8[%c0_18, %c0_19] : memref<128x128xbf16, #tpu.memory_space<vmem>>, vector<128x128xbf16>
    %c0_20 = arith.constant 0 : index
    %c0_21 = arith.constant 0 : index
    %25 = vector.load %arg9[%c0_20, %c0_21] : memref<1x128xf32, #tpu.memory_space<vmem>>, vector<1x128xf32>
    %26 = arith.truncf %23 : vector<32x128xf32> to vector<32x128xbf16>
    %cst_22 = arith.constant dense<0.000000e+00> : vector<32x128xf32>
    %27 = tpu.matmul %26, %24, %cst_22 {dimension_numbers = #tpu.dot_dimension_numbers<[1], [0], [0], [1], [0, 0, 1, 1], [], []>} : vector<32x128xbf16>, vector<128x128xbf16>, vector<32x128xf32> -> vector<32x128xf32>
    %28 = vector.broadcast %25 : vector<1x128xf32> to vector<32x128xf32>
    %29 = arith.addf %27, %28 : vector<32x128xf32>
    %c0_23 = arith.constant 0 : index
    %c0_24 = arith.constant 0 : index
    %30 = vector.load %arg10[%c0_23, %c0_24] : memref<128x128xbf16, #tpu.memory_space<vmem>>, vector<128x128xbf16>
    %c0_25 = arith.constant 0 : index
    %c0_26 = arith.constant 0 : index
    %31 = vector.load %arg11[%c0_25, %c0_26] : memref<1x128xf32, #tpu.memory_space<vmem>>, vector<1x128xf32>
    %32 = arith.truncf %29 : vector<32x128xf32> to vector<32x128xbf16>
    %cst_27 = arith.constant dense<0.000000e+00> : vector<32x128xf32>
    %33 = tpu.matmul %32, %30, %cst_27 {dimension_numbers = #tpu.dot_dimension_numbers<[1], [0], [0], [1], [0, 0, 1, 1], [], []>} : vector<32x128xbf16>, vector<128x128xbf16>, vector<32x128xf32> -> vector<32x128xf32>
    %34 = vector.broadcast %31 : vector<1x128xf32> to vector<32x128xf32>
    %35 = arith.addf %33, %34 : vector<32x128xf32>
    %cst_28 = arith.constant 0.000000e+00 : f32
    %36 = vector.broadcast %cst_28 : f32 to vector<32x128xf32>
    %37 = arith.maximumf %35, %36 : vector<32x128xf32>
    %c0_29 = arith.constant 0 : index
    %c0_30 = arith.constant 0 : index
    %38 = vector.load %arg12[%c0_29, %c0_30] : memref<128x128xbf16, #tpu.memory_space<vmem>>, vector<128x128xbf16>
    %c0_31 = arith.constant 0 : index
    %c0_32 = arith.constant 0 : index
    %39 = vector.load %arg13[%c0_31, %c0_32] : memref<1x128xf32, #tpu.memory_space<vmem>>, vector<1x128xf32>
    %40 = arith.truncf %37 : vector<32x128xf32> to vector<32x128xbf16>
    %cst_33 = arith.constant dense<0.000000e+00> : vector<32x128xf32>
    %41 = tpu.matmul %40, %38, %cst_33 {dimension_numbers = #tpu.dot_dimension_numbers<[1], [0], [0], [1], [0, 0, 1, 1], [], []>} : vector<32x128xbf16>, vector<128x128xbf16>, vector<32x128xf32> -> vector<32x128xf32>
    %42 = vector.broadcast %39 : vector<1x128xf32> to vector<32x128xf32>
    %43 = arith.addf %41, %42 : vector<32x128xf32>
    %cst_34 = arith.constant 0.000000e+00 : f32
    %44 = vector.broadcast %cst_34 : f32 to vector<32x128xf32>
    %45 = arith.maximumf %43, %44 : vector<32x128xf32>
    %c0_35 = arith.constant 0 : index
    %c0_36 = arith.constant 0 : index
    %46 = vector.load %arg14[%c0_35, %c0_36] : memref<128x128xbf16, #tpu.memory_space<vmem>>, vector<128x128xbf16>
    %c0_37 = arith.constant 0 : index
    %c0_38 = arith.constant 0 : index
    %47 = vector.load %arg15[%c0_37, %c0_38] : memref<1x128xf32, #tpu.memory_space<vmem>>, vector<1x128xf32>
    %48 = arith.truncf %45 : vector<32x128xf32> to vector<32x128xbf16>
    %cst_39 = arith.constant dense<0.000000e+00> : vector<32x128xf32>
    %49 = tpu.matmul %48, %46, %cst_39 {dimension_numbers = #tpu.dot_dimension_numbers<[1], [0], [0], [1], [0, 0, 1, 1], [], []>} : vector<32x128xbf16>, vector<128x128xbf16>, vector<32x128xf32> -> vector<32x128xf32>
    %50 = vector.broadcast %47 : vector<1x128xf32> to vector<32x128xf32>
    %51 = arith.addf %49, %50 : vector<32x128xf32>
    %cst_40 = arith.constant 0.000000e+00 : f32
    %52 = vector.broadcast %cst_40 : f32 to vector<32x128xf32>
    %53 = arith.maximumf %51, %52 : vector<32x128xf32>
    %c0_41 = arith.constant 0 : index
    %c0_42 = arith.constant 0 : index
    %54 = vector.load %arg16[%c0_41, %c0_42] : memref<128x784xbf16, #tpu.memory_space<vmem>>, vector<128x784xbf16>
    %c0_43 = arith.constant 0 : index
    %c0_44 = arith.constant 0 : index
    %55 = vector.load %arg17[%c0_43, %c0_44] : memref<1x784xf32, #tpu.memory_space<vmem>>, vector<1x784xf32>
    %56 = arith.truncf %53 : vector<32x128xf32> to vector<32x128xbf16>
    %cst_45 = arith.constant dense<0.000000e+00> : vector<32x784xf32>
    %57 = tpu.matmul %56, %54, %cst_45 {dimension_numbers = #tpu.dot_dimension_numbers<[1], [0], [0], [1], [0, 0, 1, 1], [], []>} : vector<32x128xbf16>, vector<128x784xbf16>, vector<32x784xf32> -> vector<32x784xf32>
    %58 = vector.broadcast %55 : vector<1x784xf32> to vector<32x784xf32>
    %59 = arith.addf %57, %58 : vector<32x784xf32>
    %cst_46 = arith.constant 0.000000e+00 : f32
    %60 = vector.broadcast %cst_46 : f32 to vector<32x784xf32>
    %61 = arith.subf %60, %59 : vector<32x784xf32>
    %62 = math.exp %61 : vector<32x784xf32>
    %cst_47 = arith.constant 1.000000e+00 : f32
    %63 = vector.broadcast %cst_47 : f32 to vector<32x784xf32>
    %64 = arith.addf %63, %62 : vector<32x784xf32>
    %65 = tpu.reciprocal %64 {approx = true} : vector<32x784xf32> -> vector<32x784xf32>
    %c0_48 = arith.constant 0 : index
    %c0_49 = arith.constant 0 : index
    %66 = vector.load %arg18[%c0_48, %c0_49] : memref<32x784xf32, #tpu.memory_space<vmem>>, vector<32x784xf32>
    tpu.vector_store %arg18[%c0_48, %c0_49], %65 {strides = array<i32>} : memref<32x784xf32, #tpu.memory_space<vmem>>, vector<32x784xf32>,
    return
  }
  func.func @transform_0(%arg0: i32) -> (i32, i32) {
    %c0_i32 = arith.constant 0 : i32
    %c0_i32_0 = arith.constant 0 : i32
    return %arg0, %c0_i32 : i32, i32
  }
  func.func @transform_1(%arg0: i32) -> (i32, i32) {
    %c0_i32 = arith.constant 0 : i32
    %c0_i32_0 = arith.constant 0 : i32
    %c0_i32_1 = arith.constant 0 : i32
    return %c0_i32, %c0_i32_0 : i32, i32
  }
  func.func @transform_2(%arg0: i32) -> (i32, i32) {
    %c0_i32 = arith.constant 0 : i32
    %c0_i32_0 = arith.constant 0 : i32
    %c0_i32_1 = arith.constant 0 : i32
    return %c0_i32, %c0_i32_0 : i32, i32
  }
  func.func @transform_3(%arg0: i32) -> (i32, i32) {
    %c0_i32 = arith.constant 0 : i32
    %c0_i32_0 = arith.constant 0 : i32
    %c0_i32_1 = arith.constant 0 : i32
    return %c0_i32, %c0_i32_0 : i32, i32
  }
  func.func @transform_4(%arg0: i32) -> (i32, i32) {
    %c0_i32 = arith.constant 0 : i32
    %c0_i32_0 = arith.constant 0 : i32
    %c0_i32_1 = arith.constant 0 : i32
    return %c0_i32, %c0_i32_0 : i32, i32
  }
  func.func @transform_5(%arg0: i32) -> (i32, i32) {
    %c0_i32 = arith.constant 0 : i32
    %c0_i32_0 = arith.constant 0 : i32
    %c0_i32_1 = arith.constant 0 : i32
    return %c0_i32, %c0_i32_0 : i32, i32
  }
  func.func @transform_6(%arg0: i32) -> (i32, i32) {
    %c0_i32 = arith.constant 0 : i32
    %c0_i32_0 = arith.constant 0 : i32
    %c0_i32_1 = arith.constant 0 : i32
    return %c0_i32, %c0_i32_0 : i32, i32
  }
  func.func @transform_7(%arg0: i32) -> (i32, i32) {
    %c0_i32 = arith.constant 0 : i32
    %c0_i32_0 = arith.constant 0 : i32
    %c0_i32_1 = arith.constant 0 : i32
    return %c0_i32, %c0_i32_0 : i32, i32
  }
  func.func @transform_8(%arg0: i32) -> (i32, i32) {
    %c0_i32 = arith.constant 0 : i32
    %c0_i32_0 = arith.constant 0 : i32
    %c0_i32_1 = arith.constant 0 : i32
    return %c0_i32, %c0_i32_0 : i32, i32
  }
  func.func @transform_9(%arg0: i32) -> (i32, i32) {
    %c0_i32 = arith.constant 0 : i32
    %c0_i32_0 = arith.constant 0 : i32
    %c0_i32_1 = arith.constant 0 : i32
    return %c0_i32, %c0_i32_0 : i32, i32
  }
  func.func @transform_10(%arg0: i32) -> (i32, i32) {
    %c0_i32 = arith.constant 0 : i32
    %c0_i32_0 = arith.constant 0 : i32
    %c0_i32_1 = arith.constant 0 : i32
    return %c0_i32, %c0_i32_0 : i32, i32
  }
  func.func @transform_11(%arg0: i32) -> (i32, i32) {
    %c0_i32 = arith.constant 0 : i32
    %c0_i32_0 = arith.constant 0 : i32
    %c0_i32_1 = arith.constant 0 : i32
    return %c0_i32, %c0_i32_0 : i32, i32
  }
  func.func @transform_12(%arg0: i32) -> (i32, i32) {
    %c0_i32 = arith.constant 0 : i32
    %c0_i32_0 = arith.constant 0 : i32
    %c0_i32_1 = arith.constant 0 : i32
    return %c0_i32, %c0_i32_0 : i32, i32
  }
  func.func @transform_13(%arg0: i32) -> (i32, i32) {
    %c0_i32 = arith.constant 0 : i32
    %c0_i32_0 = arith.constant 0 : i32
    %c0_i32_1 = arith.constant 0 : i32
    return %c0_i32, %c0_i32_0 : i32, i32
  }
  func.func @transform_14(%arg0: i32) -> (i32, i32) {
    %c0_i32 = arith.constant 0 : i32
    %c0_i32_0 = arith.constant 0 : i32
    %c0_i32_1 = arith.constant 0 : i32
    return %c0_i32, %c0_i32_0 : i32, i32
  }
  func.func @transform_15(%arg0: i32) -> (i32, i32) {
    %c0_i32 = arith.constant 0 : i32
    %c0_i32_0 = arith.constant 0 : i32
    %c0_i32_1 = arith.constant 0 : i32
    return %c0_i32, %c0_i32_0 : i32, i32
  }
  func.func @transform_16(%arg0: i32) -> (i32, i32) {
    %c0_i32 = arith.constant 0 : i32
    %c0_i32_0 = arith.constant 0 : i32
    %c0_i32_1 = arith.constant 0 : i32
    return %c0_i32, %c0_i32_0 : i32, i32
  }
  func.func @transform_17(%arg0: i32) -> (i32, i32) {
    %c0_i32 = arith.constant 0 : i32
    %c0_i32_0 = arith.constant 0 : i32
    return %arg0, %c0_i32 : i32, i32
  }
}

</mosaic_0001>

<llo_original>
// kernel: tpu_custom_call.1
$region0: #{tpu_custom_call.1}
  #allocation0 [shape = 'u32[]', space=smem, size = 0x4, offset = 0x4, fixed_abs, tag = 'smem constant byte address 0x4 - core index']
  #allocation1 [shape = 'u32[72,128]{1,0:T(1,128)}', space=vmem, size = 0x9000, scoped, tag = 'internal scratch']
  %s0 = inlined_call_operand.vmem [shape: bf16[64,784], index: 0, kind: input, shape index: {}]
  %s1 = inlined_call_operand.vmem [shape: bf16[784,128], index: 1, kind: input, shape index: {}]
  %s2 = inlined_call_operand.vmem [shape: f32[1,128], index: 2, kind: input, shape index: {}]
  %s3 = inlined_call_operand.vmem [shape: bf16[128,128], index: 3, kind: input, shape index: {}]
  %s4 = inlined_call_operand.vmem [shape: f32[1,128], index: 4, kind: input, shape index: {}]
  %s5 = inlined_call_operand.vmem [shape: bf16[128,128], index: 5, kind: input, shape index: {}]
  %s6 = inlined_call_operand.vmem [shape: f32[1,128], index: 6, kind: input, shape index: {}]
  %s7 = inlined_call_operand.vmem [shape: bf16[128,128], index: 7, kind: input, shape index: {}]
  %s8 = inlined_call_operand.vmem [shape: f32[1,128], index: 8, kind: input, shape index: {}]
  %s9 = inlined_call_operand.hbm [shape: bf16[128,128], index: 9, kind: input, shape index: {}]
  %s10 = inlined_call_operand.vmem [shape: f32[1,128], index: 10, kind: input, shape index: {}]
  %s11 = inlined_call_operand.hbm [shape: bf16[128,128], index: 11, kind: input, shape index: {}]
  %s12 = inlined_call_operand.vmem [shape: f32[1,128], index: 12, kind: input, shape index: {}]
  %s13 = inlined_call_operand.hbm [shape: bf16[128,128], index: 13, kind: input, shape index: {}]
  %s14 = inlined_call_operand.vmem [shape: f32[1,128], index: 14, kind: input, shape index: {}]
  %s15 = inlined_call_operand.vmem [shape: bf16[128,784], index: 15, kind: input, shape index: {}]
  %s16 = inlined_call_operand.vmem [shape: f32[1,784], index: 16, kind: input, shape index: {}]
  %s17 = inlined_call_operand.hbm [shape: f32[64,784], index: 17, kind: output, shape index: {}]
  %s18 = sld [smem:[#allocation0]]
  $region113: #{tpu_custom_call.1} parent=0
    _
  %s20 = ssub.s32 1, %s18
  %s21 = scalar_select 0, %s20, %s18
  $region1: #{tpu_custom_call.1} parent=0
    #allocation2 [shape = 'u8[32768]{0}', space=vmem, size = 0x8000, scoped, tag = 'input window, operand 9, single buffered']
    #allocation3 [shape = 's32[2]{0}', space=sflag, size = 0x8, scoped, tag = 'scoped memory for tpu_custom_call.1']
    #allocation4 [shape = 's32[2]{0}', space=sflag, size = 0x8, scoped, tag = 'scoped memory for tpu_custom_call.1']
    #allocation5 [shape = 'u8[32768]{0}', space=vmem, size = 0x8000, scoped, tag = 'input window, operand 11, single buffered']
    #allocation6 [shape = 's32[1]{0}', space=sflag, size = 0x4, scoped, tag = 'scoped memory for tpu_custom_call.1']
    #allocation7 [shape = 'u8[32768]{0}', space=vmem, size = 0x8000, scoped, tag = 'input window, operand 13, single buffered']
    #allocation8 [shape = 'u8[229376]{0}', space=vmem, size = 0x38000, scoped, tag = 'output window, operand 0']
    %22 = vsyncpa [#allocation3], 0
    %23 = vsyncpa [#allocation6], 0
    %24 = vsyncpa [#allocation4], 0
    %s25 = scalar_lea.sflag [#allocation4], 1
    %26 = vsyncpa %s25, 0
    loop: start=0, step=1, limit=4
    $region2: #{tpu_custom_call.1} parent=1 // loop_pre_header
      _
    $region3: #{tpu_custom_call.1} parent=1 // loop_header
      %s28 = sphi 0, %s32
      %p29 = scmp.ge.s32.totalorder %s28, 4
      %s38 = sphi 0, %s40
      %s41 = sphi 0, %s38
      %s42 = sphi 0, %s41
      %s58 = sphi 0, %s42
      %s62 = sphi 0, %s62
      %s64 = sphi 0, %s62
      %s65 = sphi 0, %s64
      %s79 = sphi 0, %s65
      %s83 = sphi 0, %s83
      %s85 = sphi 0, %s83
      %s86 = sphi 0, %s85
      %s100 = sphi 0, %s86
      %s104 = sphi 0, %s104
      %s106 = sphi 0, %s104
      %s107 = sphi 0, %s106
      %s121 = sphi 0, %s107
      %s125 = sphi 0, %s125
      %s127 = sphi 0, %s125
      %s128 = sphi 0, %s127
      %s142 = sphi 0, %s128
      %s146 = sphi 0, %s146
      %s148 = sphi 0, %s146
      %s149 = sphi 0, %s148
      %s163 = sphi 0, %s149
      %s167 = sphi 0, %s167
      %s169 = sphi 0, %s167
      %s170 = sphi 0, %s169
      %s184 = sphi 0, %s170
      %s188 = sphi 0, %s188
      %s190 = sphi 0, %s188
      %s191 = sphi 0, %s190
      %s205 = sphi 0, %s191
      %s209 = sphi 0, %s209
      %s211 = sphi 0, %s209
      %s212 = sphi 0, %s211
      %s226 = sphi 0, %s212
      %s230 = sphi 0, %s230
      %s232 = sphi 0, %s230
      %s233 = sphi 0, %s232
      %s247 = sphi 0, %s233
      %s251 = sphi 0, %s251
      %s253 = sphi 0, %s251
      %s254 = sphi 0, %s253
      %s268 = sphi 0, %s254
      %s272 = sphi 0, %s272
      %s274 = sphi 0, %s272
      %s275 = sphi 0, %s274
      %s289 = sphi 0, %s275
      %s293 = sphi 0, %s293
      %s295 = sphi 0, %s293
      %s296 = sphi 0, %s295
      %s310 = sphi 0, %s296
      %s314 = sphi 0, %s314
      %s316 = sphi 0, %s314
      %s317 = sphi 0, %s316
      %s331 = sphi 0, %s317
      %s335 = sphi 0, %s335
      %s337 = sphi 0, %s335
      %s338 = sphi 0, %s337
      %s352 = sphi 0, %s338
      %s356 = sphi 0, %s356
      %s358 = sphi 0, %s356
      %s359 = sphi 0, %s358
      %s373 = sphi 0, %s359
      %s377 = sphi 0, %s377
      %s379 = sphi 0, %s377
      %s380 = sphi 0, %s379
      %s394 = sphi 0, %s380
      %s400 = sphi 0, %s402
      %s403 = sphi 0, %s400
      %s404 = sphi 0, %s403
      %s420 = sphi 0, %s404
    $region4: #{tpu_custom_call.1} parent=1 // loop_header_branch
      %31 = sbr.rel (%p29) target = $region8
    $region5: #{tpu_custom_call.1} parent=1 // loop_body
      %s33 = ssub.s32 %s28, 1
      %s34 = ssub.s32 %s28, 2
      %s35 = sadd.s32 %s28, 1
      %s36 = ssub.s32 %s28, %s35
      %p37 = scmp.eq.s32.totalorder %s36, 0
      %s39 = sadd.s32 %s38, 1
      %s40 = scalar_select %p37, %s38, %s39
      %p43 = pneg %p37
      %p44 = scmp.eq.s32.totalorder %s28, 1
      %p45 = por %p43, %p44
      %p46 = scmp.ne.s32.totalorder %s38, %s41
      %p47 = scmp.eq.s32.totalorder %s28, 0
      %p48 = por %p46, %p47
      %p49 = scmp.ne.s32.totalorder %s38, %s41
      %p50 = scmp.eq.s32.totalorder %s33, 1
      %p51 = por %p49, %p50
      %p52 = scmp.ne.s32.totalorder %s41, %s42
      %p53 = scmp.eq.s32.totalorder %s33, 0
      %p54 = por %p52, %p53
      %p55 = scmp.ne.s32.totalorder %s41, %s42
      %p56 = scmp.eq.s32.totalorder %s34, 1
      %p57 = por %p55, %p56
      %p59 = scmp.ne.s32.totalorder %s42, %s58
      %p60 = scmp.eq.s32.totalorder %s34, 0
      %p61 = por %p59, %p60
      %s63 = sadd.s32 %s62, 1
      %p66 = scmp.eq.s32.totalorder %s28, 1
      %p67 = scmp.ne.s32.totalorder %s62, %s64
      %p68 = scmp.eq.s32.totalorder %s28, 0
      %p69 = por %p67, %p68
      %p70 = scmp.ne.s32.totalorder %s62, %s64
      %p71 = scmp.eq.s32.totalorder %s33, 1
      %p72 = por %p70, %p71
      %p73 = scmp.ne.s32.totalorder %s64, %s65
      %p74 = scmp.eq.s32.totalorder %s33, 0
      %p75 = por %p73, %p74
      %p76 = scmp.ne.s32.totalorder %s64, %s65
      %p77 = scmp.eq.s32.totalorder %s34, 1
      %p78 = por %p76, %p77
      %p80 = scmp.ne.s32.totalorder %s65, %s79
      %p81 = scmp.eq.s32.totalorder %s34, 0
      %p82 = por %p80, %p81
      %s84 = sadd.s32 %s83, 1
      %p87 = scmp.eq.s32.totalorder %s28, 1
      %p88 = scmp.ne.s32.totalorder %s83, %s85
      %p89 = scmp.eq.s32.totalorder %s28, 0
      %p90 = por %p88, %p89
      %p91 = scmp.ne.s32.totalorder %s83, %s85
      %p92 = scmp.eq.s32.totalorder %s33, 1
      %p93 = por %p91, %p92
      %p94 = scmp.ne.s32.totalorder %s85, %s86
      %p95 = scmp.eq.s32.totalorder %s33, 0
      %p96 = por %p94, %p95
      %p97 = scmp.ne.s32.totalorder %s85, %s86
      %p98 = scmp.eq.s32.totalorder %s34, 1
      %p99 = por %p97, %p98
      %p101 = scmp.ne.s32.totalorder %s86, %s100
      %p102 = scmp.eq.s32.totalorder %s34, 0
      %p103 = por %p101, %p102
      %s105 = sadd.s32 %s104, 1
      %p108 = scmp.eq.s32.totalorder %s28, 1
      %p109 = scmp.ne.s32.totalorder %s104, %s106
      %p110 = scmp.eq.s32.totalorder %s28, 0
      %p111 = por %p109, %p110
      %p112 = scmp.ne.s32.totalorder %s104, %s106
      %p113 = scmp.eq.s32.totalorder %s33, 1
      %p114 = por %p112, %p113
      %p115 = scmp.ne.s32.totalorder %s106, %s107
      %p116 = scmp.eq.s32.totalorder %s33, 0
      %p117 = por %p115, %p116
      %p118 = scmp.ne.s32.totalorder %s106, %s107
      %p119 = scmp.eq.s32.totalorder %s34, 1
      %p120 = por %p118, %p119
      %p122 = scmp.ne.s32.totalorder %s107, %s121
      %p123 = scmp.eq.s32.totalorder %s34, 0
      %p124 = por %p122, %p123
      %s126 = sadd.s32 %s125, 1
      %p129 = scmp.eq.s32.totalorder %s28, 1
      %p130 = scmp.ne.s32.totalorder %s125, %s127
      %p131 = scmp.eq.s32.totalorder %s28, 0
      %p132 = por %p130, %p131
      %p133 = scmp.ne.s32.totalorder %s125, %s127
      %p134 = scmp.eq.s32.totalorder %s33, 1
      %p135 = por %p133, %p134
      %p136 = scmp.ne.s32.totalorder %s127, %s128
      %p137 = scmp.eq.s32.totalorder %s33, 0
      %p138 = por %p136, %p137
      %p139 = scmp.ne.s32.totalorder %s127, %s128
      %p140 = scmp.eq.s32.totalorder %s34, 1
      %p141 = por %p139, %p140
      %p143 = scmp.ne.s32.totalorder %s128, %s142
      %p144 = scmp.eq.s32.totalorder %s34, 0
      %p145 = por %p143, %p144
      %s147 = sadd.s32 %s146, 1
      %p150 = scmp.eq.s32.totalorder %s28, 1
      %p151 = scmp.ne.s32.totalorder %s146, %s148
      %p152 = scmp.eq.s32.totalorder %s28, 0
      %p153 = por %p151, %p152
      %p154 = scmp.ne.s32.totalorder %s146, %s148
      %p155 = scmp.eq.s32.totalorder %s33, 1
      %p156 = por %p154, %p155
      %p157 = scmp.ne.s32.totalorder %s148, %s149
      %p158 = scmp.eq.s32.totalorder %s33, 0
      %p159 = por %p157, %p158
      %p160 = scmp.ne.s32.totalorder %s148, %s149
      %p161 = scmp.eq.s32.totalorder %s34, 1
      %p162 = por %p160, %p161
      %p164 = scmp.ne.s32.totalorder %s149, %s163
      %p165 = scmp.eq.s32.totalorder %s34, 0
      %p166 = por %p164, %p165
      %s168 = sadd.s32 %s167, 1
      %p171 = scmp.eq.s32.totalorder %s28, 1
      %p172 = scmp.ne.s32.totalorder %s167, %s169
      %p173 = scmp.eq.s32.totalorder %s28, 0
      %p174 = por %p172, %p173
      %p175 = scmp.ne.s32.totalorder %s167, %s169
      %p176 = scmp.eq.s32.totalorder %s33, 1
      %p177 = por %p175, %p176
      %p178 = scmp.ne.s32.totalorder %s169, %s170
      %p179 = scmp.eq.s32.totalorder %s33, 0
      %p180 = por %p178, %p179
      %p181 = scmp.ne.s32.totalorder %s169, %s170
      %p182 = scmp.eq.s32.totalorder %s34, 1
      %p183 = por %p181, %p182
      %p185 = scmp.ne.s32.totalorder %s170, %s184
      %p186 = scmp.eq.s32.totalorder %s34, 0
      %p187 = por %p185, %p186
      %s189 = sadd.s32 %s188, 1
      %p192 = scmp.eq.s32.totalorder %s28, 1
      %p193 = scmp.ne.s32.totalorder %s188, %s190
      %p194 = scmp.eq.s32.totalorder %s28, 0
      %p195 = por %p193, %p194
      %p196 = scmp.ne.s32.totalorder %s188, %s190
      %p197 = scmp.eq.s32.totalorder %s33, 1
      %p198 = por %p196, %p197
      %p199 = scmp.ne.s32.totalorder %s190, %s191
      %p200 = scmp.eq.s32.totalorder %s33, 0
      %p201 = por %p199, %p200
      %p202 = scmp.ne.s32.totalorder %s190, %s191
      %p203 = scmp.eq.s32.totalorder %s34, 1
      %p204 = por %p202, %p203
      %p206 = scmp.ne.s32.totalorder %s191, %s205
      %p207 = scmp.eq.s32.totalorder %s34, 0
      %p208 = por %p206, %p207
      %s210 = sadd.s32 %s209, 1
      %p213 = scmp.eq.s32.totalorder %s28, 1
      %p214 = scmp.ne.s32.totalorder %s209, %s211
      %p215 = scmp.eq.s32.totalorder %s28, 0
      %p216 = por %p214, %p215
      %p217 = scmp.ne.s32.totalorder %s209, %s211
      %p218 = scmp.eq.s32.totalorder %s33, 1
      %p219 = por %p217, %p218
      %p220 = scmp.ne.s32.totalorder %s211, %s212
      %p221 = scmp.eq.s32.totalorder %s33, 0
      %p222 = por %p220, %p221
      %p223 = scmp.ne.s32.totalorder %s211, %s212
      %p224 = scmp.eq.s32.totalorder %s34, 1
      %p225 = por %p223, %p224
      %p227 = scmp.ne.s32.totalorder %s212, %s226
      %p228 = scmp.eq.s32.totalorder %s34, 0
      %p229 = por %p227, %p228
      %s231 = sadd.s32 %s230, 1
      %p234 = scmp.eq.s32.totalorder %s28, 1
      %p235 = scmp.ne.s32.totalorder %s230, %s232
      %p236 = scmp.eq.s32.totalorder %s28, 0
      %p237 = por %p235, %p236
      %p238 = scmp.ne.s32.totalorder %s230, %s232
      %p239 = scmp.eq.s32.totalorder %s33, 1
      %p240 = por %p238, %p239
      %p241 = scmp.ne.s32.totalorder %s232, %s233
      %p242 = scmp.eq.s32.totalorder %s33, 0
      %p243 = por %p241, %p242
      %p244 = scmp.ne.s32.totalorder %s232, %s233
      %p245 = scmp.eq.s32.totalorder %s34, 1
      %p246 = por %p244, %p245
      %p248 = scmp.ne.s32.totalorder %s233, %s247
      %p249 = scmp.eq.s32.totalorder %s34, 0
      %p250 = por %p248, %p249
      %s252 = sadd.s32 %s251, 1
      %p255 = scmp.eq.s32.totalorder %s28, 1
      %p256 = scmp.ne.s32.totalorder %s251, %s253
      %p257 = scmp.eq.s32.totalorder %s28, 0
      %p258 = por %p256, %p257
      %p259 = scmp.ne.s32.totalorder %s251, %s253
      %p260 = scmp.eq.s32.totalorder %s33, 1
      %p261 = por %p259, %p260
      %p262 = scmp.ne.s32.totalorder %s253, %s254
      %p263 = scmp.eq.s32.totalorder %s33, 0
      %p264 = por %p262, %p263
      %p265 = scmp.ne.s32.totalorder %s253, %s254
      %p266 = scmp.eq.s32.totalorder %s34, 1
      %p267 = por %p265, %p266
      %p269 = scmp.ne.s32.totalorder %s254, %s268
      %p270 = scmp.eq.s32.totalorder %s34, 0
      %p271 = por %p269, %p270
      %s273 = sadd.s32 %s272, 1
      %p276 = scmp.eq.s32.totalorder %s28, 1
      %p277 = scmp.ne.s32.totalorder %s272, %s274
      %p278 = scmp.eq.s32.totalorder %s28, 0
      %p279 = por %p277, %p278
      %p280 = scmp.ne.s32.totalorder %s272, %s274
      %p281 = scmp.eq.s32.totalorder %s33, 1
      %p282 = por %p280, %p281
      %p283 = scmp.ne.s32.totalorder %s274, %s275
      %p284 = scmp.eq.s32.totalorder %s33, 0
      %p285 = por %p283, %p284
      %p286 = scmp.ne.s32.totalorder %s274, %s275
      %p287 = scmp.eq.s32.totalorder %s34, 1
      %p288 = por %p286, %p287
      %p290 = scmp.ne.s32.totalorder %s275, %s289
      %p291 = scmp.eq.s32.totalorder %s34, 0
      %p292 = por %p290, %p291
      %s294 = sadd.s32 %s293, 1
      %p297 = scmp.eq.s32.totalorder %s28, 1
      %p298 = scmp.ne.s32.totalorder %s293, %s295
      %p299 = scmp.eq.s32.totalorder %s28, 0
      %p300 = por %p298, %p299
      %p301 = scmp.ne.s32.totalorder %s293, %s295
      %p302 = scmp.eq.s32.totalorder %s33, 1
      %p303 = por %p301, %p302
      %p304 = scmp.ne.s32.totalorder %s295, %s296
      %p305 = scmp.eq.s32.totalorder %s33, 0
      %p306 = por %p304, %p305
      %p307 = scmp.ne.s32.totalorder %s295, %s296
      %p308 = scmp.eq.s32.totalorder %s34, 1
      %p309 = por %p307, %p308
      %p311 = scmp.ne.s32.totalorder %s296, %s310
      %p312 = scmp.eq.s32.totalorder %s34, 0
      %p313 = por %p311, %p312
      %s315 = sadd.s32 %s314, 1
      %p318 = scmp.eq.s32.totalorder %s28, 1
      %p319 = scmp.ne.s32.totalorder %s314, %s316
      %p320 = scmp.eq.s32.totalorder %s28, 0
      %p321 = por %p319, %p320
      %p322 = scmp.ne.s32.totalorder %s314, %s316
      %p323 = scmp.eq.s32.totalorder %s33, 1
      %p324 = por %p322, %p323
      %p325 = scmp.ne.s32.totalorder %s316, %s317
      %p326 = scmp.eq.s32.totalorder %s33, 0
      %p327 = por %p325, %p326
      %p328 = scmp.ne.s32.totalorder %s316, %s317
      %p329 = scmp.eq.s32.totalorder %s34, 1
      %p330 = por %p328, %p329
      %p332 = scmp.ne.s32.totalorder %s317, %s331
      %p333 = scmp.eq.s32.totalorder %s34, 0
      %p334 = por %p332, %p333
      %s336 = sadd.s32 %s335, 1
      %p339 = scmp.eq.s32.totalorder %s28, 1
      %p340 = scmp.ne.s32.totalorder %s335, %s337
      %p341 = scmp.eq.s32.totalorder %s28, 0
      %p342 = por %p340, %p341
      %p343 = scmp.ne.s32.totalorder %s335, %s337
      %p344 = scmp.eq.s32.totalorder %s33, 1
      %p345 = por %p343, %p344
      %p346 = scmp.ne.s32.totalorder %s337, %s338
      %p347 = scmp.eq.s32.totalorder %s33, 0
      %p348 = por %p346, %p347
      %p349 = scmp.ne.s32.totalorder %s337, %s338
      %p350 = scmp.eq.s32.totalorder %s34, 1
      %p351 = por %p349, %p350
      %p353 = scmp.ne.s32.totalorder %s338, %s352
      %p354 = scmp.eq.s32.totalorder %s34, 0
      %p355 = por %p353, %p354
      %s357 = sadd.s32 %s356, 1
      %p360 = scmp.eq.s32.totalorder %s28, 1
      %p361 = scmp.ne.s32.totalorder %s356, %s358
      %p362 = scmp.eq.s32.totalorder %s28, 0
      %p363 = por %p361, %p362
      %p364 = scmp.ne.s32.totalorder %s356, %s358
      %p365 = scmp.eq.s32.totalorder %s33, 1
      %p366 = por %p364, %p365
      %p367 = scmp.ne.s32.totalorder %s358, %s359
      %p368 = scmp.eq.s32.totalorder %s33, 0
      %p369 = por %p367, %p368
      %p370 = scmp.ne.s32.totalorder %s358, %s359
      %p371 = scmp.eq.s32.totalorder %s34, 1
      %p372 = por %p370, %p371
      %p374 = scmp.ne.s32.totalorder %s359, %s373
      %p375 = scmp.eq.s32.totalorder %s34, 0
      %p376 = por %p374, %p375
      %s378 = sadd.s32 %s377, 1
      %p381 = scmp.eq.s32.totalorder %s28, 1
      %p382 = scmp.ne.s32.totalorder %s377, %s379
      %p383 = scmp.eq.s32.totalorder %s28, 0
      %p384 = por %p382, %p383
      %p385 = scmp.ne.s32.totalorder %s377, %s379
      %p386 = scmp.eq.s32.totalorder %s33, 1
      %p387 = por %p385, %p386
      %p388 = scmp.ne.s32.totalorder %s379, %s380
      %p389 = scmp.eq.s32.totalorder %s33, 0
      %p390 = por %p388, %p389
      %p391 = scmp.ne.s32.totalorder %s379, %s380
      %p392 = scmp.eq.s32.totalorder %s34, 1
      %p393 = por %p391, %p392
      %p395 = scmp.ne.s32.totalorder %s380, %s394
      %p396 = scmp.eq.s32.totalorder %s34, 0
      %p397 = por %p395, %p396
      %s398 = ssub.s32 %s28, %s35
      %p399 = scmp.eq.s32.totalorder %s398, 0
      %s401 = sadd.s32 %s400, 1
      %s402 = scalar_select %p399, %s400, %s401
      %p405 = pneg %p399
      %p406 = scmp.eq.s32.totalorder %s28, 1
      %p407 = por %p405, %p406
      %p408 = scmp.ne.s32.totalorder %s400, %s403
      %p409 = scmp.eq.s32.totalorder %s28, 0
      %p410 = por %p408, %p409
      %p411 = scmp.ne.s32.totalorder %s400, %s403
      %p412 = scmp.eq.s32.totalorder %s33, 1
      %p413 = por %p411, %p412
      %p414 = scmp.ne.s32.totalorder %s403, %s404
      %p415 = scmp.eq.s32.totalorder %s33, 0
      %p416 = por %p414, %p415
      %p417 = scmp.ne.s32.totalorder %s403, %s404
      %p418 = scmp.eq.s32.totalorder %s34, 1
      %p419 = por %p417, %p418
      %p421 = scmp.ne.s32.totalorder %s404, %s420
      %p422 = scmp.eq.s32.totalorder %s34, 0
      %p423 = por %p421, %p422
      %p424 = scmp.le.s32.totalorder 1, %s28
      %p425 = scmp.lt.s32.totalorder %s28, 3
      %p426 = pnand %p424, %p425
      %p427 = pneg %p426
      // Predicated region
      $region9: #{tpu_custom_call.1} parent=5 // pred_check
        _
      $region10: #{tpu_custom_call.1} parent=5 // pred_check_branch
        %429 = sbr.rel (%p426) target = $region12
      $region11: #{tpu_custom_call.1} parent=5 // pred_region
        %s430 = ssub.s32 %s28, 1
        // Predicated region
        $region13: #{tpu_custom_call.1} parent=11 // pred_check
          %p431 = pneg %p75
        $region14: #{tpu_custom_call.1} parent=11 // pred_check_branch
          %433 = sbr.rel (%p431) target = $region16
        $region15: #{tpu_custom_call.1} parent=11 // pred_region
          _
        $region16: #{tpu_custom_call.1} parent=11 // pred_fallthru
          _
        // Predicated region
        $region17: #{tpu_custom_call.1} parent=11 // pred_check
          %p434 = pneg %p96
        $region18: #{tpu_custom_call.1} parent=11 // pred_check_branch
          %436 = sbr.rel (%p434) target = $region20
        $region19: #{tpu_custom_call.1} parent=11 // pred_region
          _
        $region20: #{tpu_custom_call.1} parent=11 // pred_fallthru
          _
        // Predicated region
        $region21: #{tpu_custom_call.1} parent=11 // pred_check
          %p437 = pneg %p117
        $region22: #{tpu_custom_call.1} parent=11 // pred_check_branch
          %439 = sbr.rel (%p437) target = $region24
        $region23: #{tpu_custom_call.1} parent=11 // pred_region
          _
        $region24: #{tpu_custom_call.1} parent=11 // pred_fallthru
          _
        // Predicated region
        $region25: #{tpu_custom_call.1} parent=11 // pred_check
          %p440 = pneg %p138
        $region26: #{tpu_custom_call.1} parent=11 // pred_check_branch
          %442 = sbr.rel (%p440) target = $region28
        $region27: #{tpu_custom_call.1} parent=11 // pred_region
          _
        $region28: #{tpu_custom_call.1} parent=11 // pred_fallthru
          _
        // Predicated region
        $region29: #{tpu_custom_call.1} parent=11 // pred_check
          %p443 = pneg %p159
        $region30: #{tpu_custom_call.1} parent=11 // pred_check_branch
          %445 = sbr.rel (%p443) target = $region32
        $region31: #{tpu_custom_call.1} parent=11 // pred_region
          _
        $region32: #{tpu_custom_call.1} parent=11 // pred_fallthru
          _
        // Predicated region
        $region33: #{tpu_custom_call.1} parent=11 // pred_check
          %p446 = pneg %p180
        $region34: #{tpu_custom_call.1} parent=11 // pred_check_branch
          %448 = sbr.rel (%p446) target = $region36
        $region35: #{tpu_custom_call.1} parent=11 // pred_region
          _
        $region36: #{tpu_custom_call.1} parent=11 // pred_fallthru
          _
        // Predicated region
        $region37: #{tpu_custom_call.1} parent=11 // pred_check
          %p449 = pneg %p201
        $region38: #{tpu_custom_call.1} parent=11 // pred_check_branch
          %451 = sbr.rel (%p449) target = $region40
        $region39: #{tpu_custom_call.1} parent=11 // pred_region
          _
        $region40: #{tpu_custom_call.1} parent=11 // pred_fallthru
          _
        // Predicated region
        $region41: #{tpu_custom_call.1} parent=11 // pred_check
          %p452 = pneg %p222
        $region42: #{tpu_custom_call.1} parent=11 // pred_check_branch
          %454 = sbr.rel (%p452) target = $region44
        $region43: #{tpu_custom_call.1} parent=11 // pred_region
          _
        $region44: #{tpu_custom_call.1} parent=11 // pred_fallthru
          _
        // Predicated region
        $region45: #{tpu_custom_call.1} parent=11 // pred_check
          %p455 = pneg %p243
        $region46: #{tpu_custom_call.1} parent=11 // pred_check_branch
          %457 = sbr.rel (%p455) target = $region48
        $region47: #{tpu_custom_call.1} parent=11 // pred_region
          %459 = vsyncadd [#allocation3], 0
          %s460 = sshll.u32 %s9, 4
          %s461 = int_to_ptr.hbm [resolvable:$true] %s460
          %s462 = sshll.u32 [#allocation2], 4
          %s463 = int_to_ptr.vmem [resolvable:$true] %s462
          %468 = dma.hbm_to_vmem [thread:$0]  %s461, 1024, %s463, [#allocation3], 64, 64, 4
        $region48: #{tpu_custom_call.1} parent=11 // pred_fallthru
          _
        // Predicated region
        $region49: #{tpu_custom_call.1} parent=11 // pred_check
          %p469 = pneg %p264
        $region50: #{tpu_custom_call.1} parent=11 // pred_check_branch
          %471 = sbr.rel (%p469) target = $region52
        $region51: #{tpu_custom_call.1} parent=11 // pred_region
          _
        $region52: #{tpu_custom_call.1} parent=11 // pred_fallthru
          _
        // Predicated region
        $region53: #{tpu_custom_call.1} parent=11 // pred_check
          %p472 = pneg %p285
        $region54: #{tpu_custom_call.1} parent=11 // pred_check_branch
          %474 = sbr.rel (%p472) target = $region56
        $region55: #{tpu_custom_call.1} parent=11 // pred_region
          %476 = vsyncadd [#allocation6], 0
          %s477 = sshll.u32 %s11, 4
          %s478 = int_to_ptr.hbm [resolvable:$true] %s477
          %s479 = sshll.u32 [#allocation5], 4
          %s480 = int_to_ptr.vmem [resolvable:$true] %s479
          %485 = dma.hbm_to_vmem [thread:$0]  %s478, 1024, %s480, [#allocation6], 64, 64, 4
        $region56: #{tpu_custom_call.1} parent=11 // pred_fallthru
          _
        // Predicated region
        $region57: #{tpu_custom_call.1} parent=11 // pred_check
          %p486 = pneg %p306
        $region58: #{tpu_custom_call.1} parent=11 // pred_check_branch
          %488 = sbr.rel (%p486) target = $region60
        $region59: #{tpu_custom_call.1} parent=11 // pred_region
          _
        $region60: #{tpu_custom_call.1} parent=11 // pred_fallthru
          _
        // Predicated region
        $region61: #{tpu_custom_call.1} parent=11 // pred_check
          %p489 = pneg %p327
        $region62: #{tpu_custom_call.1} parent=11 // pred_check_branch
          %491 = sbr.rel (%p489) target = $region64
        $region63: #{tpu_custom_call.1} parent=11 // pred_region
          %493 = vsyncadd [#allocation6], 0
          %s494 = sshll.u32 %s13, 4
          %s495 = int_to_ptr.hbm [resolvable:$true] %s494
          %s496 = sshll.u32 [#allocation7], 4
          %s497 = int_to_ptr.vmem [resolvable:$true] %s496
          %502 = dma.hbm_to_vmem [thread:$0]  %s495, 1024, %s497, [#allocation6], 64, 64, 4
        $region64: #{tpu_custom_call.1} parent=11 // pred_fallthru
          _
        // Predicated region
        $region65: #{tpu_custom_call.1} parent=11 // pred_check
          %p503 = pneg %p348
        $region66: #{tpu_custom_call.1} parent=11 // pred_check_branch
          %505 = sbr.rel (%p503) target = $region68
        $region67: #{tpu_custom_call.1} parent=11 // pred_region
          _
        $region68: #{tpu_custom_call.1} parent=11 // pred_fallthru
          _
        // Predicated region
        $region69: #{tpu_custom_call.1} parent=11 // pred_check
          %p506 = pneg %p369
        $region70: #{tpu_custom_call.1} parent=11 // pred_check_branch
          %508 = sbr.rel (%p506) target = $region72
        $region71: #{tpu_custom_call.1} parent=11 // pred_region
          _
        $region72: #{tpu_custom_call.1} parent=11 // pred_fallthru
          _
        // Predicated region
        $region73: #{tpu_custom_call.1} parent=11 // pred_check
          %p509 = pneg %p390
        $region74: #{tpu_custom_call.1} parent=11 // pred_check_branch
          %511 = sbr.rel (%p509) target = $region76
        $region75: #{tpu_custom_call.1} parent=11 // pred_region
          _
        $region76: #{tpu_custom_call.1} parent=11 // pred_fallthru
          _
      $region12: #{tpu_custom_call.1} parent=5 // pred_fallthru
        _
      %p512 = scmp.lt.s32.totalorder %s28, 2
      // Predicated region
      $region77: #{tpu_custom_call.1} parent=5 // pred_check
        %p513 = pneg %p512
      $region78: #{tpu_custom_call.1} parent=5 // pred_check_branch
        %515 = sbr.rel (%p513) target = $region80
      $region79: #{tpu_custom_call.1} parent=5 // pred_region
        // Predicated region
        $region81: #{tpu_custom_call.1} parent=79 // pred_check
          %p516 = pneg %p48
        $region82: #{tpu_custom_call.1} parent=79 // pred_check_branch
          %518 = sbr.rel (%p516) target = $region84
        $region83: #{tpu_custom_call.1} parent=79 // pred_region
          %s519 = smul.u32 4, %s28
          %p520 = scmp.lt.s32.totalorder %s519, 7
          %s521 = scalar_select %p520, %s519, 7
          %s522 = smul.addr %s521, 7
          %s523 = smul.addr %s522, 4
          %s524 = scalar_lea.vmem %s0, %s523
          %s525 = smul.u32 4, %s28
        $region84: #{tpu_custom_call.1} parent=79 // pred_fallthru
          _
      $region80: #{tpu_custom_call.1} parent=5 // pred_fallthru
        _
      %p526 = scmp.le.s32.totalorder 1, %s28
      %p527 = scmp.lt.s32.totalorder %s28, 3
      %p528 = pnand %p526, %p527
      %p529 = pneg %p528
      // Predicated region
      $region85: #{tpu_custom_call.1} parent=5 // pred_check
        _
      $region86: #{tpu_custom_call.1} parent=5 // pred_check_branch
        %531 = sbr.rel (%p528) target = $region88
      $region87: #{tpu_custom_call.1} parent=5 // pred_region
        %s532 = ssub.s32 %s28, 1
        // Predicated region
        $region89: #{tpu_custom_call.1} parent=87 // pred_check
          %p533 = pneg %p243
        $region90: #{tpu_custom_call.1} parent=87 // pred_check_branch
          %535 = sbr.rel (%p533) target = $region92
        $region91: #{tpu_custom_call.1} parent=87 // pred_region
          %537 = dma.done [#allocation3], 1024
        $region92: #{tpu_custom_call.1} parent=87 // pred_fallthru
          _
        // Predicated region
        $region93: #{tpu_custom_call.1} parent=87 // pred_check
          %p538 = pneg %p285
        $region94: #{tpu_custom_call.1} parent=87 // pred_check_branch
          %540 = sbr.rel (%p538) target = $region96
        $region95: #{tpu_custom_call.1} parent=87 // pred_region
          %542 = dma.done [#allocation6], 1024
        $region96: #{tpu_custom_call.1} parent=87 // pred_fallthru
          _
        // Predicated region
        $region97: #{tpu_custom_call.1} parent=87 // pred_check
          %p543 = pneg %p327
        $region98: #{tpu_custom_call.1} parent=87 // pred_check_branch
          %545 = sbr.rel (%p543) target = $region100
        $region99: #{tpu_custom_call.1} parent=87 // pred_region
          %547 = dma.done [#allocation6], 1024
        $region100: #{tpu_custom_call.1} parent=87 // pred_fallthru
          _
        %s548 = smul.u32 4, %s33
        %p549 = scmp.lt.s32.totalorder %s548, 7
        %s550 = scalar_select %p549, %s548, 7
        %s551 = smul.addr %s550, 7
        %s552 = smul.addr %s551, 4
        %s553 = scalar_lea.vmem %s0, %s552
        %p554 = pneg %p54
        %p555 = pneg %p51
        %p556 = pneg %p75
        %p557 = pneg %p72
        %p558 = pneg %p96
        %p559 = pneg %p93
        %p560 = pneg %p117
        %p561 = pneg %p114
        %p562 = pneg %p138
        %p563 = pneg %p135
        %p564 = pneg %p159
        %p565 = pneg %p156
        %p566 = pneg %p180
        %p567 = pneg %p177
        %p568 = pneg %p201
        %p569 = pneg %p198
        %p570 = pneg %p222
        %p571 = pneg %p219
        %p572 = pneg %p243
        %p573 = pneg %p240
        %p574 = pneg %p264
        %p575 = pneg %p261
        %p576 = pneg %p285
        %p577 = pneg %p282
        %p578 = pneg %p306
        %p579 = pneg %p303
        %p580 = pneg %p327
        %p581 = pneg %p324
        %p582 = pneg %p348
        %p583 = pneg %p345
        %p584 = pneg %p369
        %p585 = pneg %p366
        %p586 = pneg %p390
        %p587 = pneg %p387
        %p588 = pneg %p416
        %p589 = pneg %p413
        %s590 = sand.u32 %s403, 1
        %s591 = scalar_lea.sflag [#allocation4], %s590
        %s592 = sand.u32 %s403, 1
        %s593 = smul.addr %s592, 224
        %s594 = scalar_lea.vmem [#allocation8], %s593
        %s595 = smul.u32 4, %s33
        %p596 = scmp.lt.s32.totalorder %s595, 7
        %s597 = scalar_select %p596, %s595, 7
        %s598 = smul.addr %s597, 7
        %s599 = smul.addr %s598, 4
        %s600 = scalar_lea.vmem %s0, %s599
        %s601 = smul.u32 4, %s33
        %s602 = smul.u32 4, %s33
        %v604 = vld [vmem:[%s600] sm:$0xff]
        %v605 = vld [vmem:[%s600 + $0x8] sm:$0xff]
        %v606 = vld [vmem:[%s600 + $0x10] sm:$0xff]
        %v607 = vld [vmem:[%s600 + $0x18] sm:$0xf]
        %v608 = vld [vmem:[%s600 + $0x1c] sm:$0xff]
        %v609 = vld [vmem:[%s600 + $0x24] sm:$0xff]
        %v610 = vld [vmem:[%s600 + $0x2c] sm:$0xff]
        %v611 = vld [vmem:[%s600 + $0x34] sm:$0xf]
        %v612 = vld [vmem:[%s600 + $0x38] sm:$0xff]
        %v613 = vld [vmem:[%s600 + $0x40] sm:$0xff]
        %v614 = vld [vmem:[%s600 + $0x48] sm:$0xff]
        %v615 = vld [vmem:[%s600 + $0x50] sm:$0xf]
        %v616 = vld [vmem:[%s600 + $0x54] sm:$0xff]
        %v617 = vld [vmem:[%s600 + $0x5c] sm:$0xff]
        %v618 = vld [vmem:[%s600 + $0x64] sm:$0xff]
        %v619 = vld [vmem:[%s600 + $0x6c] sm:$0xf]
        %v620 = vld [vmem:[%s1] sm:$0xf]
        %v621 = vld [vmem:[%s1 + $0x4] sm:$0xf]
        %v622 = vld [vmem:[%s1 + $0x8] sm:$0xf]
        %v623 = vld [vmem:[%s1 + $0xc] sm:$0xf]
        %v624 = vld [vmem:[%s1 + $0x10] sm:$0xf]
        %v625 = vld [vmem:[%s1 + $0x14] sm:$0xf]
        %v626 = vld [vmem:[%s1 + $0x18] sm:$0xf]
        %v627 = vld [vmem:[%s1 + $0x1c] sm:$0xf]
        %v628 = vld [vmem:[%s1 + $0x20] sm:$0xf]
        %v629 = vld [vmem:[%s1 + $0x24] sm:$0xf]
        %v630 = vld [vmem:[%s1 + $0x28] sm:$0xf]
        %v631 = vld [vmem:[%s1 + $0x2c] sm:$0xf]
        %v632 = vld [vmem:[%s1 + $0x30] sm:$0xf]
        %v633 = vld [vmem:[%s1 + $0x34] sm:$0xf]
        %v634 = vld [vmem:[%s1 + $0x38] sm:$0xf]
        %v635 = vld [vmem:[%s1 + $0x3c] sm:$0xf]
        %v636 = vld [vmem:[%s1 + $0x40] sm:$0xf]
        %v637 = vld [vmem:[%s1 + $0x44] sm:$0xf]
        %v638 = vld [vmem:[%s1 + $0x48] sm:$0xf]
        %v639 = vld [vmem:[%s1 + $0x4c] sm:$0xf]
        %v640 = vld [vmem:[%s1 + $0x50] sm:$0xf]
        %v641 = vld [vmem:[%s1 + $0x54] sm:$0xf]
        %v642 = vld [vmem:[%s1 + $0x58] sm:$0xf]
        %v643 = vld [vmem:[%s1 + $0x5c] sm:$0xf]
        %v644 = vld [vmem:[%s1 + $0x60] sm:$0xf]
        %v645 = vld [vmem:[%s1 + $0x64] sm:$0xf]
        %v646 = vld [vmem:[%s1 + $0x68] sm:$0xf]
        %v647 = vld [vmem:[%s1 + $0x6c] sm:$0xf]
        %v648 = vld [vmem:[%s1 + $0x70] sm:$0xf]
        %v649 = vld [vmem:[%s1 + $0x74] sm:$0xf]
        %v650 = vld [vmem:[%s1 + $0x78] sm:$0xf]
        %v651 = vld [vmem:[%s1 + $0x7c] sm:$0xf]
        %v652 = vld [vmem:[%s1 + $0x80] sm:$0xf]
        %v653 = vld [vmem:[%s1 + $0x84] sm:$0xf]
        %v654 = vld [vmem:[%s1 + $0x88] sm:$0xf]
        %v655 = vld [vmem:[%s1 + $0x8c] sm:$0xf]
        %v656 = vld [vmem:[%s1 + $0x90] sm:$0xf]
        %v657 = vld [vmem:[%s1 + $0x94] sm:$0xf]
        %v658 = vld [vmem:[%s1 + $0x98] sm:$0xf]
        %v659 = vld [vmem:[%s1 + $0x9c] sm:$0xf]
        %v660 = vld [vmem:[%s1 + $0xa0] sm:$0xf]
        %v661 = vld [vmem:[%s1 + $0xa4] sm:$0xf]
        %v662 = vld [vmem:[%s1 + $0xa8] sm:$0xf]
        %v663 = vld [vmem:[%s1 + $0xac] sm:$0xf]
        %v664 = vld [vmem:[%s1 + $0xb0] sm:$0xf]
        %v665 = vld [vmem:[%s1 + $0xb4] sm:$0xf]
        %v666 = vld [vmem:[%s1 + $0xb8] sm:$0xf]
        %v667 = vld [vmem:[%s1 + $0xbc] sm:$0xf]
        %v668 = vld [vmem:[%s1 + $0xc0] sm:$0xf]
        %v669 = vld [vmem:[%s1 + $0xc4] sm:$0xf]
        %v670 = vld [vmem:[%s1 + $0xc8] sm:$0xf]
        %v671 = vld [vmem:[%s1 + $0xcc] sm:$0xf]
        %v672 = vld [vmem:[%s1 + $0xd0] sm:$0xf]
        %v673 = vld [vmem:[%s1 + $0xd4] sm:$0xf]
        %v674 = vld [vmem:[%s1 + $0xd8] sm:$0xf]
        %v675 = vld [vmem:[%s1 + $0xdc] sm:$0xf]
        %v676 = vld [vmem:[%s1 + $0xe0] sm:$0xf]
        %v677 = vld [vmem:[%s1 + $0xe4] sm:$0xf]
        %v678 = vld [vmem:[%s1 + $0xe8] sm:$0xf]
        %v679 = vld [vmem:[%s1 + $0xec] sm:$0xf]
        %v680 = vld [vmem:[%s1 + $0xf0] sm:$0xf]
        %v681 = vld [vmem:[%s1 + $0xf4] sm:$0xf]
        %v682 = vld [vmem:[%s1 + $0xf8] sm:$0xf]
        %v683 = vld [vmem:[%s1 + $0xfc] sm:$0xf]
        %v684 = vld [vmem:[%s1 + $0x100] sm:$0xf]
        %v685 = vld [vmem:[%s1 + $0x104] sm:$0xf]
        %v686 = vld [vmem:[%s1 + $0x108] sm:$0xf]
        %v687 = vld [vmem:[%s1 + $0x10c] sm:$0xf]
        %v688 = vld [vmem:[%s1 + $0x110] sm:$0xf]
        %v689 = vld [vmem:[%s1 + $0x114] sm:$0xf]
        %v690 = vld [vmem:[%s1 + $0x118] sm:$0xf]
        %v691 = vld [vmem:[%s1 + $0x11c] sm:$0xf]
        %v692 = vld [vmem:[%s1 + $0x120] sm:$0xf]
        %v693 = vld [vmem:[%s1 + $0x124] sm:$0xf]
        %v694 = vld [vmem:[%s1 + $0x128] sm:$0xf]
        %v695 = vld [vmem:[%s1 + $0x12c] sm:$0xf]
        %v696 = vld [vmem:[%s1 + $0x130] sm:$0xf]
        %v697 = vld [vmem:[%s1 + $0x134] sm:$0xf]
        %v698 = vld [vmem:[%s1 + $0x138] sm:$0xf]
        %v699 = vld [vmem:[%s1 + $0x13c] sm:$0xf]
        %v700 = vld [vmem:[%s1 + $0x140] sm:$0xf]
        %v701 = vld [vmem:[%s1 + $0x144] sm:$0xf]
        %v702 = vld [vmem:[%s1 + $0x148] sm:$0xf]
        %v703 = vld [vmem:[%s1 + $0x14c] sm:$0xf]
        %v704 = vld [vmem:[%s1 + $0x150] sm:$0xf]
        %v705 = vld [vmem:[%s1 + $0x154] sm:$0xf]
        %v706 = vld [vmem:[%s1 + $0x158] sm:$0xf]
        %v707 = vld [vmem:[%s1 + $0x15c] sm:$0xf]
        %v708 = vld [vmem:[%s1 + $0x160] sm:$0xf]
        %v709 = vld [vmem:[%s1 + $0x164] sm:$0xf]
        %v710 = vld [vmem:[%s1 + $0x168] sm:$0xf]
        %v711 = vld [vmem:[%s1 + $0x16c] sm:$0xf]
        %v712 = vld [vmem:[%s1 + $0x170] sm:$0xf]
        %v713 = vld [vmem:[%s1 + $0x174] sm:$0xf]
        %v714 = vld [vmem:[%s1 + $0x178] sm:$0xf]
        %v715 = vld [vmem:[%s1 + $0x17c] sm:$0xf]
        %v716 = vld [vmem:[%s1 + $0x180] sm:$0xf]
        %v717 = vld [vmem:[%s1 + $0x184] sm:$0xf]
        %v718 = vld [vmem:[%s2] sm:$0x1]
        %v720 = vperm.slane %v718, 0
        %v738 = vunpack.c.l.b16 %v604
        %v739 = vunpack.c.h.b16 %v604
        %v740 = vunpack.c.l.b16 %v605
        %v741 = vunpack.c.h.b16 %v605
        %v742 = vunpack.c.l.b16 %v606
        %v743 = vunpack.c.h.b16 %v606
        %v744 = vunpack.c.l.b16 %v607
        %v745 = vunpack.c.l.b16 %v608
        %v746 = vunpack.c.h.b16 %v608
        %v747 = vunpack.c.l.b16 %v609
        %v748 = vunpack.c.h.b16 %v609
        %v749 = vunpack.c.l.b16 %v610
        %v750 = vunpack.c.h.b16 %v610
        %v751 = vunpack.c.l.b16 %v611
        %v752 = vunpack.c.l.b16 %v612
        %v753 = vunpack.c.h.b16 %v612
        %v754 = vunpack.c.l.b16 %v613
        %v755 = vunpack.c.h.b16 %v613
        %v756 = vunpack.c.l.b16 %v614
        %v757 = vunpack.c.h.b16 %v614
        %v758 = vunpack.c.l.b16 %v615
        %v759 = vunpack.c.l.b16 %v616
        %v760 = vunpack.c.h.b16 %v616
        %v761 = vunpack.c.l.b16 %v617
        %v762 = vunpack.c.h.b16 %v617
        %v763 = vunpack.c.l.b16 %v618
        %v764 = vunpack.c.h.b16 %v618
        %v765 = vunpack.c.l.b16 %v619
        %v766 = vpack.c.b16 %v745, %v738
        %v767 = vpack.c.b16 %v746, %v739
        %v768 = vpack.c.b16 %v747, %v740
        %v769 = vpack.c.b16 %v748, %v741
        %v770 = vpack.c.b16 %v749, %v742
        %v771 = vpack.c.b16 %v750, %v743
        %v772 = vpack.c.b16 %v751, %v744
        %v773 = vpack.c.b16 %v759, %v752
        %v774 = vpack.c.b16 %v760, %v753
        %v775 = vpack.c.b16 %v761, %v754
        %v776 = vpack.c.b16 %v762, %v755
        %v777 = vpack.c.b16 %v763, %v756
        %v778 = vpack.c.b16 %v764, %v757
        %v779 = vpack.c.b16 %v765, %v758
        %v890 = vunpack.c.l.b16 %v620
        %v891 = vunpack.c.l.b16 %v621
        %v892 = vunpack.c.l.b16 %v622
        %v893 = vunpack.c.l.b16 %v623
        %v894 = vunpack.c.l.b16 %v624
        %v895 = vunpack.c.l.b16 %v625
        %v896 = vunpack.c.l.b16 %v626
        %v897 = vunpack.c.l.b16 %v627
        %v898 = vunpack.c.l.b16 %v628
        %v899 = vunpack.c.l.b16 %v629
        %v900 = vunpack.c.l.b16 %v630
        %v901 = vunpack.c.l.b16 %v631
        %v902 = vunpack.c.l.b16 %v632
        %v903 = vunpack.c.l.b16 %v633
        %v904 = vunpack.c.l.b16 %v634
        %v905 = vunpack.c.l.b16 %v635
        %v906 = vunpack.c.l.b16 %v636
        %v907 = vunpack.c.l.b16 %v637
        %v908 = vunpack.c.l.b16 %v638
        %v909 = vunpack.c.l.b16 %v639
        %v910 = vunpack.c.l.b16 %v640
        %v911 = vunpack.c.l.b16 %v641
        %v912 = vunpack.c.l.b16 %v642
        %v913 = vunpack.c.l.b16 %v643
        %v914 = vunpack.c.l.b16 %v644
        %v915 = vunpack.c.l.b16 %v645
        %v916 = vunpack.c.l.b16 %v646
        %v917 = vunpack.c.l.b16 %v647
        %v918 = vunpack.c.l.b16 %v648
        %v919 = vunpack.c.l.b16 %v649
        %v920 = vunpack.c.l.b16 %v650
        %v921 = vunpack.c.l.b16 %v651
        %v922 = vunpack.c.l.b16 %v652
        %v923 = vunpack.c.l.b16 %v653
        %v924 = vunpack.c.l.b16 %v654
        %v925 = vunpack.c.l.b16 %v655
        %v926 = vunpack.c.l.b16 %v656
        %v927 = vunpack.c.l.b16 %v657
        %v928 = vunpack.c.l.b16 %v658
        %v929 = vunpack.c.l.b16 %v659
        %v930 = vunpack.c.l.b16 %v660
        %v931 = vunpack.c.l.b16 %v661
        %v932 = vunpack.c.l.b16 %v662
        %v933 = vunpack.c.l.b16 %v663
        %v934 = vunpack.c.l.b16 %v664
        %v935 = vunpack.c.l.b16 %v665
        %v936 = vunpack.c.l.b16 %v666
        %v937 = vunpack.c.l.b16 %v667
        %v938 = vunpack.c.l.b16 %v668
        %v939 = vunpack.c.l.b16 %v669
        %v940 = vunpack.c.l.b16 %v670
        %v941 = vunpack.c.l.b16 %v671
        %v942 = vunpack.c.l.b16 %v672
        %v943 = vunpack.c.l.b16 %v673
        %v944 = vunpack.c.l.b16 %v674
        %v945 = vunpack.c.l.b16 %v675
        %v946 = vunpack.c.l.b16 %v676
        %v947 = vunpack.c.l.b16 %v677
        %v948 = vunpack.c.l.b16 %v678
        %v949 = vunpack.c.l.b16 %v679
        %v950 = vunpack.c.l.b16 %v680
        %v951 = vunpack.c.l.b16 %v681
        %v952 = vunpack.c.l.b16 %v682
        %v953 = vunpack.c.l.b16 %v683
        %v954 = vunpack.c.l.b16 %v684
        %v955 = vunpack.c.l.b16 %v685
        %v956 = vunpack.c.l.b16 %v686
        %v957 = vunpack.c.l.b16 %v687
        %v958 = vunpack.c.l.b16 %v688
        %v959 = vunpack.c.l.b16 %v689
        %v960 = vunpack.c.l.b16 %v690
        %v961 = vunpack.c.l.b16 %v691
        %v962 = vunpack.c.l.b16 %v692
        %v963 = vunpack.c.l.b16 %v693
        %v964 = vunpack.c.l.b16 %v694
        %v965 = vunpack.c.l.b16 %v695
        %v966 = vunpack.c.l.b16 %v696
        %v967 = vunpack.c.l.b16 %v697
        %v968 = vunpack.c.l.b16 %v698
        %v969 = vunpack.c.l.b16 %v699
        %v970 = vunpack.c.l.b16 %v700
        %v971 = vunpack.c.l.b16 %v701
        %v972 = vunpack.c.l.b16 %v702
        %v973 = vunpack.c.l.b16 %v703
        %v974 = vunpack.c.l.b16 %v704
        %v975 = vunpack.c.l.b16 %v705
        %v976 = vunpack.c.l.b16 %v706
        %v977 = vunpack.c.l.b16 %v707
        %v978 = vunpack.c.l.b16 %v708
        %v979 = vunpack.c.l.b16 %v709
        %v980 = vunpack.c.l.b16 %v710
        %v981 = vunpack.c.l.b16 %v711
        %v982 = vunpack.c.l.b16 %v712
        %v983 = vunpack.c.l.b16 %v713
        %v984 = vunpack.c.l.b16 %v714
        %v985 = vunpack.c.l.b16 %v715
        %v986 = vunpack.c.l.b16 %v716
        %v987 = vunpack.c.l.b16 %v717
        %v988 = vpack.c.b16 %v891, %v890
        %v989 = vpack.c.b16 %v893, %v892
        %v990 = vpack.c.b16 %v895, %v894
        %v991 = vpack.c.b16 %v897, %v896
        %v992 = vpack.c.b16 %v899, %v898
        %v993 = vpack.c.b16 %v901, %v900
        %v994 = vpack.c.b16 %v903, %v902
        %v995 = vpack.c.b16 %v905, %v904
        %v996 = vpack.c.b16 %v907, %v906
        %v997 = vpack.c.b16 %v909, %v908
        %v998 = vpack.c.b16 %v911, %v910
        %v999 = vpack.c.b16 %v913, %v912
        %v1000 = vpack.c.b16 %v915, %v914
        %v1001 = vpack.c.b16 %v917, %v916
        %v1002 = vpack.c.b16 %v919, %v918
        %v1003 = vpack.c.b16 %v921, %v920
        %v1004 = vpack.c.b16 %v923, %v922
        %v1005 = vpack.c.b16 %v925, %v924
        %v1006 = vpack.c.b16 %v927, %v926
        %v1007 = vpack.c.b16 %v929, %v928
        %v1008 = vpack.c.b16 %v931, %v930
        %v1009 = vpack.c.b16 %v933, %v932
        %v1010 = vpack.c.b16 %v935, %v934
        %v1011 = vpack.c.b16 %v937, %v936
        %v1012 = vpack.c.b16 %v939, %v938
        %v1013 = vpack.c.b16 %v941, %v940
        %v1014 = vpack.c.b16 %v943, %v942
        %v1015 = vpack.c.b16 %v945, %v944
        %v1016 = vpack.c.b16 %v947, %v946
        %v1017 = vpack.c.b16 %v949, %v948
        %v1018 = vpack.c.b16 %v951, %v950
        %v1019 = vpack.c.b16 %v953, %v952
        %v1020 = vpack.c.b16 %v955, %v954
        %v1021 = vpack.c.b16 %v957, %v956
        %v1022 = vpack.c.b16 %v959, %v958
        %v1023 = vpack.c.b16 %v961, %v960
        %v1024 = vpack.c.b16 %v963, %v962
        %v1025 = vpack.c.b16 %v965, %v964
        %v1026 = vpack.c.b16 %v967, %v966
        %v1027 = vpack.c.b16 %v969, %v968
        %v1028 = vpack.c.b16 %v971, %v970
        %v1029 = vpack.c.b16 %v973, %v972
        %v1030 = vpack.c.b16 %v975, %v974
        %v1031 = vpack.c.b16 %v977, %v976
        %v1032 = vpack.c.b16 %v979, %v978
        %v1033 = vpack.c.b16 %v981, %v980
        %v1034 = vpack.c.b16 %v983, %v982
        %v1035 = vpack.c.b16 %v985, %v984
        %v1036 = vpack.c.b16 %v987, %v986
        %vm1086 = vcmask 130048
        %v1088 = vsel %vm1086, %v772, 0
        %v1091 = vsel %vm1086, %v779, 0
        %1093 = vmatpush.bf16.msra.mxu0 %v995
        %1094 = vmatpush.bf16.msra.mxu0 %v994
        %1095 = vmatpush.bf16.msra.mxu0 %v993
        %1096 = vmatpush.bf16.msra.mxu0 %v992
        %1097 = vmatpush.bf16.msra.mxu0 %v991
        %1098 = vmatpush.bf16.msra.mxu0 %v990
        %1099 = vmatpush.bf16.msra.mxu0 %v989
        %1100 = vmatpush.bf16.msra.mxu0 %v988
        %1101 = vmatmul.bf16.gmra.mxu0 %v766
        %v1102 = vpop.f32.mrf.mxu0
        %v1103 = vadd.f32 %v720, %v1102
        %v1104 = vpop.f32.mrf.mxu0
        %v1105 = vadd.f32 %v720, %v1104
        %1106 = vmatmul.bf16.gmra.mxu0 %v773
        %v1107 = vpop.f32.mrf.mxu0
        %v1108 = vadd.f32 %v720, %v1107
        %v1109 = vpop.f32.mrf.mxu0
        %v1110 = vadd.f32 %v720, %v1109
        %1111 = vdwg.mxu0
        %1112 = vmatpush.bf16.msra.mxu0 %v1003
        %1113 = vmatpush.bf16.msra.mxu0 %v1002
        %1114 = vmatpush.bf16.msra.mxu0 %v1001
        %1115 = vmatpush.bf16.msra.mxu0 %v1000
        %1116 = vmatpush.bf16.msra.mxu0 %v999
        %1117 = vmatpush.bf16.msra.mxu0 %v998
        %1118 = vmatpush.bf16.msra.mxu0 %v997
        %1119 = vmatpush.bf16.msra.mxu0 %v996
        %1120 = vmatmul.bf16.gmra.mxu0 %v767
        %v1121 = vpop.f32.mrf.mxu0
        %v1122 = vadd.f32 %v1103, %v1121
        %v1123 = vpop.f32.mrf.mxu0
        %v1124 = vadd.f32 %v1105, %v1123
        %1125 = vmatmul.bf16.gmra.mxu0 %v774
        %v1126 = vpop.f32.mrf.mxu0
        %v1127 = vadd.f32 %v1108, %v1126
        %v1128 = vpop.f32.mrf.mxu0
        %v1129 = vadd.f32 %v1110, %v1128
        %1130 = vdwg.mxu0
        %1131 = vmatpush.bf16.msra.mxu0 %v1011
        %1132 = vmatpush.bf16.msra.mxu0 %v1010
        %1133 = vmatpush.bf16.msra.mxu0 %v1009
        %1134 = vmatpush.bf16.msra.mxu0 %v1008
        %1135 = vmatpush.bf16.msra.mxu0 %v1007
        %1136 = vmatpush.bf16.msra.mxu0 %v1006
        %1137 = vmatpush.bf16.msra.mxu0 %v1005
        %1138 = vmatpush.bf16.msra.mxu0 %v1004
        %1139 = vmatmul.bf16.gmra.mxu0 %v768
        %v1140 = vpop.f32.mrf.mxu0
        %v1141 = vadd.f32 %v1122, %v1140
        %v1142 = vpop.f32.mrf.mxu0
        %v1143 = vadd.f32 %v1124, %v1142
        %1144 = vmatmul.bf16.gmra.mxu0 %v775
        %v1145 = vpop.f32.mrf.mxu0
        %v1146 = vadd.f32 %v1127, %v1145
        %v1147 = vpop.f32.mrf.mxu0
        %v1148 = vadd.f32 %v1129, %v1147
        %1149 = vdwg.mxu0
        %1150 = vmatpush.bf16.msra.mxu0 %v1019
        %1151 = vmatpush.bf16.msra.mxu0 %v1018
        %1152 = vmatpush.bf16.msra.mxu0 %v1017
        %1153 = vmatpush.bf16.msra.mxu0 %v1016
        %1154 = vmatpush.bf16.msra.mxu0 %v1015
        %1155 = vmatpush.bf16.msra.mxu0 %v1014
        %1156 = vmatpush.bf16.msra.mxu0 %v1013
        %1157 = vmatpush.bf16.msra.mxu0 %v1012
        %1158 = vmatmul.bf16.gmra.mxu0 %v769
        %v1159 = vpop.f32.mrf.mxu0
        %v1160 = vadd.f32 %v1141, %v1159
        %v1161 = vpop.f32.mrf.mxu0
        %v1162 = vadd.f32 %v1143, %v1161
        %1163 = vmatmul.bf16.gmra.mxu0 %v776
        %v1164 = vpop.f32.mrf.mxu0
        %v1165 = vadd.f32 %v1146, %v1164
        %v1166 = vpop.f32.mrf.mxu0
        %v1167 = vadd.f32 %v1148, %v1166
        %1168 = vdwg.mxu0
        %1169 = vmatpush.bf16.msra.mxu0 %v1027
        %1170 = vmatpush.bf16.msra.mxu0 %v1026
        %1171 = vmatpush.bf16.msra.mxu0 %v1025
        %1172 = vmatpush.bf16.msra.mxu0 %v1024
        %1173 = vmatpush.bf16.msra.mxu0 %v1023
        %1174 = vmatpush.bf16.msra.mxu0 %v1022
        %1175 = vmatpush.bf16.msra.mxu0 %v1021
        %1176 = vmatpush.bf16.msra.mxu0 %v1020
        %1177 = vmatmul.bf16.gmra.mxu0 %v770
        %v1178 = vpop.f32.mrf.mxu0
        %v1179 = vadd.f32 %v1160, %v1178
        %v1180 = vpop.f32.mrf.mxu0
        %v1181 = vadd.f32 %v1162, %v1180
        %1182 = vmatmul.bf16.gmra.mxu0 %v777
        %v1183 = vpop.f32.mrf.mxu0
        %v1184 = vadd.f32 %v1165, %v1183
        %v1185 = vpop.f32.mrf.mxu0
        %v1186 = vadd.f32 %v1167, %v1185
        %1187 = vdwg.mxu0
        %1188 = vmatpush.bf16.msra.mxu0 %v1035
        %1189 = vmatpush.bf16.msra.mxu0 %v1034
        %1190 = vmatpush.bf16.msra.mxu0 %v1033
        %1191 = vmatpush.bf16.msra.mxu0 %v1032
        %1192 = vmatpush.bf16.msra.mxu0 %v1031
        %1193 = vmatpush.bf16.msra.mxu0 %v1030
        %1194 = vmatpush.bf16.msra.mxu0 %v1029
        %1195 = vmatpush.bf16.msra.mxu0 %v1028
        %1196 = vmatmul.bf16.gmra.mxu0 %v771
        %v1197 = vpop.f32.mrf.mxu0
        %v1198 = vadd.f32 %v1179, %v1197
        %v1199 = vpop.f32.mrf.mxu0
        %v1200 = vadd.f32 %v1181, %v1199
        %1201 = vmatmul.bf16.gmra.mxu0 %v778
        %v1202 = vpop.f32.mrf.mxu0
        %v1203 = vadd.f32 %v1184, %v1202
        %v1204 = vpop.f32.mrf.mxu0
        %v1205 = vadd.f32 %v1186, %v1204
        %1206 = vdwg.mxu0
        %1207 = vmatpush.bf16.msra.mxu0 0
        %1208 = vmatpush.bf16.msra.mxu0 0
        %1209 = vmatpush.bf16.msra.mxu0 0
        %1210 = vmatpush.bf16.msra.mxu0 0
        %1211 = vmatpush.bf16.msra.mxu0 0
        %1212 = vmatpush.bf16.msra.mxu0 0
        %1213 = vmatpush.bf16.msra.mxu0 0
        %1214 = vmatpush.bf16.msra.mxu0 %v1036
        %1215 = vmatmul.bf16.gmra.mxu0 %v1088
        %v1216 = vpop.f32.mrf.mxu0
        %v1217 = vadd.f32 %v1198, %v1216
        %v1218 = vpop.f32.mrf.mxu0
        %v1219 = vadd.f32 %v1200, %v1218
        %1220 = vmatmul.bf16.gmra.mxu0 %v1091
        %v1221 = vpop.f32.mrf.mxu0
        %v1222 = vadd.f32 %v1203, %v1221
        %v1223 = vpop.f32.mrf.mxu0
        %v1224 = vadd.f32 %v1205, %v1223
        %1225 = vdwg.mxu0
        %v1226 = vmax.f32 %v1217, 0.0
        %v1227 = vmax.f32 %v1219, 0.0
        %v1228 = vmax.f32 %v1222, 0.0
        %v1229 = vmax.f32 %v1224, 0.0
        %v1230 = vld [vmem:[%s3] sm:$0xf]
        %v1231 = vld [vmem:[%s3 + $0x4] sm:$0xf]
        %v1232 = vld [vmem:[%s3 + $0x8] sm:$0xf]
        %v1233 = vld [vmem:[%s3 + $0xc] sm:$0xf]
        %v1234 = vld [vmem:[%s3 + $0x10] sm:$0xf]
        %v1235 = vld [vmem:[%s3 + $0x14] sm:$0xf]
        %v1236 = vld [vmem:[%s3 + $0x18] sm:$0xf]
        %v1237 = vld [vmem:[%s3 + $0x1c] sm:$0xf]
        %v1238 = vld [vmem:[%s3 + $0x20] sm:$0xf]
        %v1239 = vld [vmem:[%s3 + $0x24] sm:$0xf]
        %v1240 = vld [vmem:[%s3 + $0x28] sm:$0xf]
        %v1241 = vld [vmem:[%s3 + $0x2c] sm:$0xf]
        %v1242 = vld [vmem:[%s3 + $0x30] sm:$0xf]
        %v1243 = vld [vmem:[%s3 + $0x34] sm:$0xf]
        %v1244 = vld [vmem:[%s3 + $0x38] sm:$0xf]
        %v1245 = vld [vmem:[%s3 + $0x3c] sm:$0xf]
        %v1246 = vld [vmem:[%s4] sm:$0x1]
        %v1247 = vpack.c.bf16 %v1227, %v1226
        %v1248 = vpack.c.bf16 %v1229, %v1228
        %v1250 = vperm.slane %v1246, 0
        %v1268 = vunpack.c.l.b16 %v1230
        %v1269 = vunpack.c.l.b16 %v1231
        %v1270 = vunpack.c.l.b16 %v1232
        %v1271 = vunpack.c.l.b16 %v1233
        %v1272 = vunpack.c.l.b16 %v1234
        %v1273 = vunpack.c.l.b16 %v1235
        %v1274 = vunpack.c.l.b16 %v1236
        %v1275 = vunpack.c.l.b16 %v1237
        %v1276 = vunpack.c.l.b16 %v1238
        %v1277 = vunpack.c.l.b16 %v1239
        %v1278 = vunpack.c.l.b16 %v1240
        %v1279 = vunpack.c.l.b16 %v1241
        %v1280 = vunpack.c.l.b16 %v1242
        %v1281 = vunpack.c.l.b16 %v1243
        %v1282 = vunpack.c.l.b16 %v1244
        %v1283 = vunpack.c.l.b16 %v1245
        %v1284 = vpack.c.b16 %v1269, %v1268
        %v1285 = vpack.c.b16 %v1271, %v1270
        %v1286 = vpack.c.b16 %v1273, %v1272
        %v1287 = vpack.c.b16 %v1275, %v1274
        %v1288 = vpack.c.b16 %v1277, %v1276
        %v1289 = vpack.c.b16 %v1279, %v1278
        %v1290 = vpack.c.b16 %v1281, %v1280
        %v1291 = vpack.c.b16 %v1283, %v1282
        %1300 = vmatpush.bf16.msra.mxu0 %v1291
        %1301 = vmatpush.bf16.msra.mxu0 %v1290
        %1302 = vmatpush.bf16.msra.mxu0 %v1289
        %1303 = vmatpush.bf16.msra.mxu0 %v1288
        %1304 = vmatpush.bf16.msra.mxu0 %v1287
        %1305 = vmatpush.bf16.msra.mxu0 %v1286
        %1306 = vmatpush.bf16.msra.mxu0 %v1285
        %1307 = vmatpush.bf16.msra.mxu0 %v1284
        %1308 = vmatmul.bf16.gmra.mxu0 %v1247
        %v1309 = vpop.f32.mrf.mxu0
        %v1310 = vadd.f32 %v1250, %v1309
        %v1311 = vpop.f32.mrf.mxu0
        %v1312 = vadd.f32 %v1250, %v1311
        %1313 = vmatmul.bf16.gmra.mxu0 %v1248
        %v1314 = vpop.f32.mrf.mxu0
        %v1315 = vadd.f32 %v1250, %v1314
        %v1316 = vpop.f32.mrf.mxu0
        %v1317 = vadd.f32 %v1250, %v1316
        %1318 = vdwg.mxu0
        %v1319 = vmax.f32 %v1310, 0.0
        %v1320 = vmax.f32 %v1312, 0.0
        %v1321 = vmax.f32 %v1315, 0.0
        %v1322 = vmax.f32 %v1317, 0.0
        %v1323 = vld [vmem:[%s5] sm:$0xf]
        %v1324 = vld [vmem:[%s5 + $0x4] sm:$0xf]
        %v1325 = vld [vmem:[%s5 + $0x8] sm:$0xf]
        %v1326 = vld [vmem:[%s5 + $0xc] sm:$0xf]
        %v1327 = vld [vmem:[%s5 + $0x10] sm:$0xf]
        %v1328 = vld [vmem:[%s5 + $0x14] sm:$0xf]
        %v1329 = vld [vmem:[%s5 + $0x18] sm:$0xf]
        %v1330 = vld [vmem:[%s5 + $0x1c] sm:$0xf]
        %v1331 = vld [vmem:[%s5 + $0x20] sm:$0xf]
        %v1332 = vld [vmem:[%s5 + $0x24] sm:$0xf]
        %v1333 = vld [vmem:[%s5 + $0x28] sm:$0xf]
        %v1334 = vld [vmem:[%s5 + $0x2c] sm:$0xf]
        %v1335 = vld [vmem:[%s5 + $0x30] sm:$0xf]
        %v1336 = vld [vmem:[%s5 + $0x34] sm:$0xf]
        %v1337 = vld [vmem:[%s5 + $0x38] sm:$0xf]
        %v1338 = vld [vmem:[%s5 + $0x3c] sm:$0xf]
        %v1339 = vld [vmem:[%s6] sm:$0x1]
        %v1340 = vpack.c.bf16 %v1320, %v1319
        %v1341 = vpack.c.bf16 %v1322, %v1321
        %v1343 = vperm.slane %v1339, 0
        %v1361 = vunpack.c.l.b16 %v1323
        %v1362 = vunpack.c.l.b16 %v1324
        %v1363 = vunpack.c.l.b16 %v1325
        %v1364 = vunpack.c.l.b16 %v1326
        %v1365 = vunpack.c.l.b16 %v1327
        %v1366 = vunpack.c.l.b16 %v1328
        %v1367 = vunpack.c.l.b16 %v1329
        %v1368 = vunpack.c.l.b16 %v1330
        %v1369 = vunpack.c.l.b16 %v1331
        %v1370 = vunpack.c.l.b16 %v1332
        %v1371 = vunpack.c.l.b16 %v1333
        %v1372 = vunpack.c.l.b16 %v1334
        %v1373 = vunpack.c.l.b16 %v1335
        %v1374 = vunpack.c.l.b16 %v1336
        %v1375 = vunpack.c.l.b16 %v1337
        %v1376 = vunpack.c.l.b16 %v1338
        %v1377 = vpack.c.b16 %v1362, %v1361
        %v1378 = vpack.c.b16 %v1364, %v1363
        %v1379 = vpack.c.b16 %v1366, %v1365
        %v1380 = vpack.c.b16 %v1368, %v1367
        %v1381 = vpack.c.b16 %v1370, %v1369
        %v1382 = vpack.c.b16 %v1372, %v1371
        %v1383 = vpack.c.b16 %v1374, %v1373
        %v1384 = vpack.c.b16 %v1376, %v1375
        %1393 = vmatpush.bf16.msra.mxu0 %v1384
        %1394 = vmatpush.bf16.msra.mxu0 %v1383
        %1395 = vmatpush.bf16.msra.mxu0 %v1382
        %1396 = vmatpush.bf16.msra.mxu0 %v1381
        %1397 = vmatpush.bf16.msra.mxu0 %v1380
        %1398 = vmatpush.bf16.msra.mxu0 %v1379
        %1399 = vmatpush.bf16.msra.mxu0 %v1378
        %1400 = vmatpush.bf16.msra.mxu0 %v1377
        %1401 = vmatmul.bf16.gmra.mxu0 %v1340
        %v1402 = vpop.f32.mrf.mxu0
        %v1403 = vadd.f32 %v1343, %v1402
        %v1404 = vpop.f32.mrf.mxu0
        %v1405 = vadd.f32 %v1343, %v1404
        %1406 = vmatmul.bf16.gmra.mxu0 %v1341
        %v1407 = vpop.f32.mrf.mxu0
        %v1408 = vadd.f32 %v1343, %v1407
        %v1409 = vpop.f32.mrf.mxu0
        %v1410 = vadd.f32 %v1343, %v1409
        %1411 = vdwg.mxu0
        %v1412 = vmax.f32 %v1403, 0.0
        %v1413 = vmax.f32 %v1405, 0.0
        %v1414 = vmax.f32 %v1408, 0.0
        %v1415 = vmax.f32 %v1410, 0.0
        %v1416 = vld [vmem:[%s7] sm:$0xf]
        %v1417 = vld [vmem:[%s7 + $0x4] sm:$0xf]
        %v1418 = vld [vmem:[%s7 + $0x8] sm:$0xf]
        %v1419 = vld [vmem:[%s7 + $0xc] sm:$0xf]
        %v1420 = vld [vmem:[%s7 + $0x10] sm:$0xf]
        %v1421 = vld [vmem:[%s7 + $0x14] sm:$0xf]
        %v1422 = vld [vmem:[%s7 + $0x18] sm:$0xf]
        %v1423 = vld [vmem:[%s7 + $0x1c] sm:$0xf]
        %v1424 = vld [vmem:[%s7 + $0x20] sm:$0xf]
        %v1425 = vld [vmem:[%s7 + $0x24] sm:$0xf]
        %v1426 = vld [vmem:[%s7 + $0x28] sm:$0xf]
        %v1427 = vld [vmem:[%s7 + $0x2c] sm:$0xf]
        %v1428 = vld [vmem:[%s7 + $0x30] sm:$0xf]
        %v1429 = vld [vmem:[%s7 + $0x34] sm:$0xf]
        %v1430 = vld [vmem:[%s7 + $0x38] sm:$0xf]
        %v1431 = vld [vmem:[%s7 + $0x3c] sm:$0xf]
        %v1432 = vld [vmem:[%s8] sm:$0x1]
        %v1433 = vpack.c.bf16 %v1413, %v1412
        %v1434 = vpack.c.bf16 %v1415, %v1414
        %v1436 = vperm.slane %v1432, 0
        %v1454 = vunpack.c.l.b16 %v1416
        %v1455 = vunpack.c.l.b16 %v1417
        %v1456 = vunpack.c.l.b16 %v1418
        %v1457 = vunpack.c.l.b16 %v1419
        %v1458 = vunpack.c.l.b16 %v1420
        %v1459 = vunpack.c.l.b16 %v1421
        %v1460 = vunpack.c.l.b16 %v1422
        %v1461 = vunpack.c.l.b16 %v1423
        %v1462 = vunpack.c.l.b16 %v1424
        %v1463 = vunpack.c.l.b16 %v1425
        %v1464 = vunpack.c.l.b16 %v1426
        %v1465 = vunpack.c.l.b16 %v1427
        %v1466 = vunpack.c.l.b16 %v1428
        %v1467 = vunpack.c.l.b16 %v1429
        %v1468 = vunpack.c.l.b16 %v1430
        %v1469 = vunpack.c.l.b16 %v1431
        %v1470 = vpack.c.b16 %v1455, %v1454
        %v1471 = vpack.c.b16 %v1457, %v1456
        %v1472 = vpack.c.b16 %v1459, %v1458
        %v1473 = vpack.c.b16 %v1461, %v1460
        %v1474 = vpack.c.b16 %v1463, %v1462
        %v1475 = vpack.c.b16 %v1465, %v1464
        %v1476 = vpack.c.b16 %v1467, %v1466
        %v1477 = vpack.c.b16 %v1469, %v1468
        %1486 = vmatpush.bf16.msra.mxu0 %v1477
        %1487 = vmatpush.bf16.msra.mxu0 %v1476
        %1488 = vmatpush.bf16.msra.mxu0 %v1475
        %1489 = vmatpush.bf16.msra.mxu0 %v1474
        %1490 = vmatpush.bf16.msra.mxu0 %v1473
        %1491 = vmatpush.bf16.msra.mxu0 %v1472
        %1492 = vmatpush.bf16.msra.mxu0 %v1471
        %1493 = vmatpush.bf16.msra.mxu0 %v1470
        %1494 = vmatmul.bf16.gmra.mxu0 %v1433
        %v1495 = vpop.f32.mrf.mxu0
        %v1496 = vadd.f32 %v1436, %v1495
        %v1497 = vpop.f32.mrf.mxu0
        %v1498 = vadd.f32 %v1436, %v1497
        %1499 = vmatmul.bf16.gmra.mxu0 %v1434
        %v1500 = vpop.f32.mrf.mxu0
        %v1501 = vadd.f32 %v1436, %v1500
        %v1502 = vpop.f32.mrf.mxu0
        %v1503 = vadd.f32 %v1436, %v1502
        %1504 = vdwg.mxu0
        %v1505 = vld [vmem:[#allocation2] sm:$0xf]
        %v1506 = vld [vmem:[#allocation2 + $0x4] sm:$0xf]
        %v1507 = vld [vmem:[#allocation2 + $0x8] sm:$0xf]
        %v1508 = vld [vmem:[#allocation2 + $0xc] sm:$0xf]
        %v1509 = vld [vmem:[#allocation2 + $0x10] sm:$0xf]
        %v1510 = vld [vmem:[#allocation2 + $0x14] sm:$0xf]
        %v1511 = vld [vmem:[#allocation2 + $0x18] sm:$0xf]
        %v1512 = vld [vmem:[#allocation2 + $0x1c] sm:$0xf]
        %v1513 = vld [vmem:[#allocation2 + $0x20] sm:$0xf]
        %v1514 = vld [vmem:[#allocation2 + $0x24] sm:$0xf]
        %v1515 = vld [vmem:[#allocation2 + $0x28] sm:$0xf]
        %v1516 = vld [vmem:[#allocation2 + $0x2c] sm:$0xf]
        %v1517 = vld [vmem:[#allocation2 + $0x30] sm:$0xf]
        %v1518 = vld [vmem:[#allocation2 + $0x34] sm:$0xf]
        %v1519 = vld [vmem:[#allocation2 + $0x38] sm:$0xf]
        %v1520 = vld [vmem:[#allocation2 + $0x3c] sm:$0xf]
        %v1521 = vld [vmem:[%s10] sm:$0x1]
        %v1522 = vpack.c.bf16 %v1498, %v1496
        %v1523 = vpack.c.bf16 %v1503, %v1501
        %v1525 = vperm.slane %v1521, 0
        %v1543 = vunpack.c.l.b16 %v1505
        %v1544 = vunpack.c.l.b16 %v1506
        %v1545 = vunpack.c.l.b16 %v1507
        %v1546 = vunpack.c.l.b16 %v1508
        %v1547 = vunpack.c.l.b16 %v1509
        %v1548 = vunpack.c.l.b16 %v1510
        %v1549 = vunpack.c.l.b16 %v1511
        %v1550 = vunpack.c.l.b16 %v1512
        %v1551 = vunpack.c.l.b16 %v1513
        %v1552 = vunpack.c.l.b16 %v1514
        %v1553 = vunpack.c.l.b16 %v1515
        %v1554 = vunpack.c.l.b16 %v1516
        %v1555 = vunpack.c.l.b16 %v1517
        %v1556 = vunpack.c.l.b16 %v1518
        %v1557 = vunpack.c.l.b16 %v1519
        %v1558 = vunpack.c.l.b16 %v1520
        %v1559 = vpack.c.b16 %v1544, %v1543
        %v1560 = vpack.c.b16 %v1546, %v1545
        %v1561 = vpack.c.b16 %v1548, %v1547
        %v1562 = vpack.c.b16 %v1550, %v1549
        %v1563 = vpack.c.b16 %v1552, %v1551
        %v1564 = vpack.c.b16 %v1554, %v1553
        %v1565 = vpack.c.b16 %v1556, %v1555
        %v1566 = vpack.c.b16 %v1558, %v1557
        %1575 = vmatpush.bf16.msra.mxu0 %v1566
        %1576 = vmatpush.bf16.msra.mxu0 %v1565
        %1577 = vmatpush.bf16.msra.mxu0 %v1564
        %1578 = vmatpush.bf16.msra.mxu0 %v1563
        %1579 = vmatpush.bf16.msra.mxu0 %v1562
        %1580 = vmatpush.bf16.msra.mxu0 %v1561
        %1581 = vmatpush.bf16.msra.mxu0 %v1560
        %1582 = vmatpush.bf16.msra.mxu0 %v1559
        %1583 = vmatmul.bf16.gmra.mxu0 %v1522
        %v1584 = vpop.f32.mrf.mxu0
        %v1585 = vadd.f32 %v1525, %v1584
        %v1586 = vpop.f32.mrf.mxu0
        %v1587 = vadd.f32 %v1525, %v1586
        %1588 = vmatmul.bf16.gmra.mxu0 %v1523
        %v1589 = vpop.f32.mrf.mxu0
        %v1590 = vadd.f32 %v1525, %v1589
        %v1591 = vpop.f32.mrf.mxu0
        %v1592 = vadd.f32 %v1525, %v1591
        %1593 = vdwg.mxu0
        %v1594 = vmax.f32 %v1585, 0.0
        %v1595 = vmax.f32 %v1587, 0.0
        %v1596 = vmax.f32 %v1590, 0.0
        %v1597 = vmax.f32 %v1592, 0.0
        %v1598 = vld [vmem:[#allocation5] sm:$0xf]
        %v1599 = vld [vmem:[#allocation5 + $0x4] sm:$0xf]
        %v1600 = vld [vmem:[#allocation5 + $0x8] sm:$0xf]
        %v1601 = vld [vmem:[#allocation5 + $0xc] sm:$0xf]
        %v1602 = vld [vmem:[#allocation5 + $0x10] sm:$0xf]
        %v1603 = vld [vmem:[#allocation5 + $0x14] sm:$0xf]
        %v1604 = vld [vmem:[#allocation5 + $0x18] sm:$0xf]
        %v1605 = vld [vmem:[#allocation5 + $0x1c] sm:$0xf]
        %v1606 = vld [vmem:[#allocation5 + $0x20] sm:$0xf]
        %v1607 = vld [vmem:[#allocation5 + $0x24] sm:$0xf]
        %v1608 = vld [vmem:[#allocation5 + $0x28] sm:$0xf]
        %v1609 = vld [vmem:[#allocation5 + $0x2c] sm:$0xf]
        %v1610 = vld [vmem:[#allocation5 + $0x30] sm:$0xf]
        %v1611 = vld [vmem:[#allocation5 + $0x34] sm:$0xf]
        %v1612 = vld [vmem:[#allocation5 + $0x38] sm:$0xf]
        %v1613 = vld [vmem:[#allocation5 + $0x3c] sm:$0xf]
        %v1614 = vld [vmem:[%s12] sm:$0x1]
        %v1615 = vpack.c.bf16 %v1595, %v1594
        %v1616 = vpack.c.bf16 %v1597, %v1596
        %v1618 = vperm.slane %v1614, 0
        %v1636 = vunpack.c.l.b16 %v1598
        %v1637 = vunpack.c.l.b16 %v1599
        %v1638 = vunpack.c.l.b16 %v1600
        %v1639 = vunpack.c.l.b16 %v1601
        %v1640 = vunpack.c.l.b16 %v1602
        %v1641 = vunpack.c.l.b16 %v1603
        %v1642 = vunpack.c.l.b16 %v1604
        %v1643 = vunpack.c.l.b16 %v1605
        %v1644 = vunpack.c.l.b16 %v1606
        %v1645 = vunpack.c.l.b16 %v1607
        %v1646 = vunpack.c.l.b16 %v1608
        %v1647 = vunpack.c.l.b16 %v1609
        %v1648 = vunpack.c.l.b16 %v1610
        %v1649 = vunpack.c.l.b16 %v1611
        %v1650 = vunpack.c.l.b16 %v1612
        %v1651 = vunpack.c.l.b16 %v1613
        %v1652 = vpack.c.b16 %v1637, %v1636
        %v1653 = vpack.c.b16 %v1639, %v1638
        %v1654 = vpack.c.b16 %v1641, %v1640
        %v1655 = vpack.c.b16 %v1643, %v1642
        %v1656 = vpack.c.b16 %v1645, %v1644
        %v1657 = vpack.c.b16 %v1647, %v1646
        %v1658 = vpack.c.b16 %v1649, %v1648
        %v1659 = vpack.c.b16 %v1651, %v1650
        %1668 = vmatpush.bf16.msra.mxu0 %v1659
        %1669 = vmatpush.bf16.msra.mxu0 %v1658
        %1670 = vmatpush.bf16.msra.mxu0 %v1657
        %1671 = vmatpush.bf16.msra.mxu0 %v1656
        %1672 = vmatpush.bf16.msra.mxu0 %v1655
        %1673 = vmatpush.bf16.msra.mxu0 %v1654
        %1674 = vmatpush.bf16.msra.mxu0 %v1653
        %1675 = vmatpush.bf16.msra.mxu0 %v1652
        %1676 = vmatmul.bf16.gmra.mxu0 %v1615
        %v1677 = vpop.f32.mrf.mxu0
        %v1678 = vadd.f32 %v1618, %v1677
        %v1679 = vpop.f32.mrf.mxu0
        %v1680 = vadd.f32 %v1618, %v1679
        %1681 = vmatmul.bf16.gmra.mxu0 %v1616
        %v1682 = vpop.f32.mrf.mxu0
        %v1683 = vadd.f32 %v1618, %v1682
        %v1684 = vpop.f32.mrf.mxu0
        %v1685 = vadd.f32 %v1618, %v1684
        %1686 = vdwg.mxu0
        %v1687 = vmax.f32 %v1678, 0.0
        %v1688 = vmax.f32 %v1680, 0.0
        %v1689 = vmax.f32 %v1683, 0.0
        %v1690 = vmax.f32 %v1685, 0.0
        %v1691 = vld [vmem:[#allocation7] sm:$0xf]
        %v1692 = vld [vmem:[#allocation7 + $0x4] sm:$0xf]
        %v1693 = vld [vmem:[#allocation7 + $0x8] sm:$0xf]
        %v1694 = vld [vmem:[#allocation7 + $0xc] sm:$0xf]
        %v1695 = vld [vmem:[#allocation7 + $0x10] sm:$0xf]
        %v1696 = vld [vmem:[#allocation7 + $0x14] sm:$0xf]
        %v1697 = vld [vmem:[#allocation7 + $0x18] sm:$0xf]
        %v1698 = vld [vmem:[#allocation7 + $0x1c] sm:$0xf]
        %v1699 = vld [vmem:[#allocation7 + $0x20] sm:$0xf]
        %v1700 = vld [vmem:[#allocation7 + $0x24] sm:$0xf]
        %v1701 = vld [vmem:[#allocation7 + $0x28] sm:$0xf]
        %v1702 = vld [vmem:[#allocation7 + $0x2c] sm:$0xf]
        %v1703 = vld [vmem:[#allocation7 + $0x30] sm:$0xf]
        %v1704 = vld [vmem:[#allocation7 + $0x34] sm:$0xf]
        %v1705 = vld [vmem:[#allocation7 + $0x38] sm:$0xf]
        %v1706 = vld [vmem:[#allocation7 + $0x3c] sm:$0xf]
        %v1707 = vld [vmem:[%s14] sm:$0x1]
        %v1708 = vpack.c.bf16 %v1688, %v1687
        %v1709 = vpack.c.bf16 %v1690, %v1689
        %v1711 = vperm.slane %v1707, 0
        %v1729 = vunpack.c.l.b16 %v1691
        %v1730 = vunpack.c.l.b16 %v1692
        %v1731 = vunpack.c.l.b16 %v1693
        %v1732 = vunpack.c.l.b16 %v1694
        %v1733 = vunpack.c.l.b16 %v1695
        %v1734 = vunpack.c.l.b16 %v1696
        %v1735 = vunpack.c.l.b16 %v1697
        %v1736 = vunpack.c.l.b16 %v1698
        %v1737 = vunpack.c.l.b16 %v1699
        %v1738 = vunpack.c.l.b16 %v1700
        %v1739 = vunpack.c.l.b16 %v1701
        %v1740 = vunpack.c.l.b16 %v1702
        %v1741 = vunpack.c.l.b16 %v1703
        %v1742 = vunpack.c.l.b16 %v1704
        %v1743 = vunpack.c.l.b16 %v1705
        %v1744 = vunpack.c.l.b16 %v1706
        %v1745 = vpack.c.b16 %v1730, %v1729
        %v1746 = vpack.c.b16 %v1732, %v1731
        %v1747 = vpack.c.b16 %v1734, %v1733
        %v1748 = vpack.c.b16 %v1736, %v1735
        %v1749 = vpack.c.b16 %v1738, %v1737
        %v1750 = vpack.c.b16 %v1740, %v1739
        %v1751 = vpack.c.b16 %v1742, %v1741
        %v1752 = vpack.c.b16 %v1744, %v1743
        %1761 = vmatpush.bf16.msra.mxu0 %v1752
        %1762 = vmatpush.bf16.msra.mxu0 %v1751
        %1763 = vmatpush.bf16.msra.mxu0 %v1750
        %1764 = vmatpush.bf16.msra.mxu0 %v1749
        %1765 = vmatpush.bf16.msra.mxu0 %v1748
        %1766 = vmatpush.bf16.msra.mxu0 %v1747
        %1767 = vmatpush.bf16.msra.mxu0 %v1746
        %1768 = vmatpush.bf16.msra.mxu0 %v1745
        %1769 = vmatmul.bf16.gmra.mxu0 %v1708
        %v1770 = vpop.f32.mrf.mxu0
        %v1771 = vadd.f32 %v1711, %v1770
        %v1772 = vpop.f32.mrf.mxu0
        %v1773 = vadd.f32 %v1711, %v1772
        %1774 = vmatmul.bf16.gmra.mxu0 %v1709
        %v1775 = vpop.f32.mrf.mxu0
        %v1776 = vadd.f32 %v1711, %v1775
        %v1777 = vpop.f32.mrf.mxu0
        %v1778 = vadd.f32 %v1711, %v1777
        %1779 = vdwg.mxu0
        %v1780 = vmax.f32 %v1771, 0.0
        %v1781 = vmax.f32 %v1773, 0.0
        %v1782 = vmax.f32 %v1776, 0.0
        %v1783 = vmax.f32 %v1778, 0.0
        %v1784 = vld [vmem:[%s15] sm:$0xff]
        %v1785 = vld [vmem:[%s15 + $0x8] sm:$0xff]
        %v1786 = vld [vmem:[%s15 + $0x10] sm:$0xff]
        %v1787 = vld [vmem:[%s15 + $0x18] sm:$0xf]
        %v1788 = vld [vmem:[%s15 + $0x1c] sm:$0xff]
        %v1789 = vld [vmem:[%s15 + $0x24] sm:$0xff]
        %v1790 = vld [vmem:[%s15 + $0x2c] sm:$0xff]
        %v1791 = vld [vmem:[%s15 + $0x34] sm:$0xf]
        %v1792 = vld [vmem:[%s15 + $0x38] sm:$0xff]
        %v1793 = vld [vmem:[%s15 + $0x40] sm:$0xff]
        %v1794 = vld [vmem:[%s15 + $0x48] sm:$0xff]
        %v1795 = vld [vmem:[%s15 + $0x50] sm:$0xf]
        %v1796 = vld [vmem:[%s15 + $0x54] sm:$0xff]
        %v1797 = vld [vmem:[%s15 + $0x5c] sm:$0xff]
        %v1798 = vld [vmem:[%s15 + $0x64] sm:$0xff]
        %v1799 = vld [vmem:[%s15 + $0x6c] sm:$0xf]
        %v1800 = vld [vmem:[%s15 + $0x70] sm:$0xff]
        %v1801 = vld [vmem:[%s15 + $0x78] sm:$0xff]
        %v1802 = vld [vmem:[%s15 + $0x80] sm:$0xff]
        %v1803 = vld [vmem:[%s15 + $0x88] sm:$0xf]
        %v1804 = vld [vmem:[%s15 + $0x8c] sm:$0xff]
        %v1805 = vld [vmem:[%s15 + $0x94] sm:$0xff]
        %v1806 = vld [vmem:[%s15 + $0x9c] sm:$0xff]
        %v1807 = vld [vmem:[%s15 + $0xa4] sm:$0xf]
        %v1808 = vld [vmem:[%s15 + $0xa8] sm:$0xff]
        %v1809 = vld [vmem:[%s15 + $0xb0] sm:$0xff]
        %v1810 = vld [vmem:[%s15 + $0xb8] sm:$0xff]
        %v1811 = vld [vmem:[%s15 + $0xc0] sm:$0xf]
        %v1812 = vld [vmem:[%s15 + $0xc4] sm:$0xff]
        %v1813 = vld [vmem:[%s15 + $0xcc] sm:$0xff]
        %v1814 = vld [vmem:[%s15 + $0xd4] sm:$0xff]
        %v1815 = vld [vmem:[%s15 + $0xdc] sm:$0xf]
        %v1816 = vld [vmem:[%s15 + $0xe0] sm:$0xff]
        %v1817 = vld [vmem:[%s15 + $0xe8] sm:$0xff]
        %v1818 = vld [vmem:[%s15 + $0xf0] sm:$0xff]
        %v1819 = vld [vmem:[%s15 + $0xf8] sm:$0xf]
        %v1820 = vld [vmem:[%s15 + $0xfc] sm:$0xff]
        %v1821 = vld [vmem:[%s15 + $0x104] sm:$0xff]
        %v1822 = vld [vmem:[%s15 + $0x10c] sm:$0xff]
        %v1823 = vld [vmem:[%s15 + $0x114] sm:$0xf]
        %v1824 = vld [vmem:[%s15 + $0x118] sm:$0xff]
        %v1825 = vld [vmem:[%s15 + $0x120] sm:$0xff]
        %v1826 = vld [vmem:[%s15 + $0x128] sm:$0xff]
        %v1827 = vld [vmem:[%s15 + $0x130] sm:$0xf]
        %v1828 = vld [vmem:[%s15 + $0x134] sm:$0xff]
        %v1829 = vld [vmem:[%s15 + $0x13c] sm:$0xff]
        %v1830 = vld [vmem:[%s15 + $0x144] sm:$0xff]
        %v1831 = vld [vmem:[%s15 + $0x14c] sm:$0xf]
        %v1832 = vld [vmem:[%s15 + $0x150] sm:$0xff]
        %v1833 = vld [vmem:[%s15 + $0x158] sm:$0xff]
        %v1834 = vld [vmem:[%s15 + $0x160] sm:$0xff]
        %v1835 = vld [vmem:[%s15 + $0x168] sm:$0xf]
        %v1836 = vld [vmem:[%s15 + $0x16c] sm:$0xff]
        %v1837 = vld [vmem:[%s15 + $0x174] sm:$0xff]
        %v1838 = vld [vmem:[%s15 + $0x17c] sm:$0xff]
        %v1839 = vld [vmem:[%s15 + $0x184] sm:$0xf]
        %v1840 = vld [vmem:[%s15 + $0x188] sm:$0xff]
        %v1841 = vld [vmem:[%s15 + $0x190] sm:$0xff]
        %v1842 = vld [vmem:[%s15 + $0x198] sm:$0xff]
        %v1843 = vld [vmem:[%s15 + $0x1a0] sm:$0xf]
        %v1844 = vld [vmem:[%s15 + $0x1a4] sm:$0xff]
        %v1845 = vld [vmem:[%s15 + $0x1ac] sm:$0xff]
        %v1846 = vld [vmem:[%s15 + $0x1b4] sm:$0xff]
        %v1847 = vld [vmem:[%s15 + $0x1bc] sm:$0xf]
        %v1848 = vld [vmem:[%s16] sm:$0x7f]
        %v1849 = vpack.c.bf16 %v1781, %v1780
        %v1850 = vpack.c.bf16 %v1783, %v1782
        %v1852 = vperm.slane %v1848, 0
        %v1853 = vperm.slane %v1848, 1
        %v1854 = vperm.slane %v1848, 2
        %v1855 = vperm.slane %v1848, 3
        %v1856 = vperm.slane %v1848, 4
        %v1857 = vperm.slane %v1848, 5
        %v1858 = vperm.slane %v1848, 6
        %v1930 = vunpack.c.l.b16 %v1784
        %v1931 = vunpack.c.h.b16 %v1784
        %v1932 = vunpack.c.l.b16 %v1785
        %v1933 = vunpack.c.h.b16 %v1785
        %v1934 = vunpack.c.l.b16 %v1786
        %v1935 = vunpack.c.h.b16 %v1786
        %v1936 = vunpack.c.l.b16 %v1787
        %v1937 = vunpack.c.l.b16 %v1788
        %v1938 = vunpack.c.h.b16 %v1788
        %v1939 = vunpack.c.l.b16 %v1789
        %v1940 = vunpack.c.h.b16 %v1789
        %v1941 = vunpack.c.l.b16 %v1790
        %v1942 = vunpack.c.h.b16 %v1790
        %v1943 = vunpack.c.l.b16 %v1791
        %v1944 = vunpack.c.l.b16 %v1792
        %v1945 = vunpack.c.h.b16 %v1792
        %v1946 = vunpack.c.l.b16 %v1793
        %v1947 = vunpack.c.h.b16 %v1793
        %v1948 = vunpack.c.l.b16 %v1794
        %v1949 = vunpack.c.h.b16 %v1794
        %v1950 = vunpack.c.l.b16 %v1795
        %v1951 = vunpack.c.l.b16 %v1796
        %v1952 = vunpack.c.h.b16 %v1796
        %v1953 = vunpack.c.l.b16 %v1797
        %v1954 = vunpack.c.h.b16 %v1797
        %v1955 = vunpack.c.l.b16 %v1798
        %v1956 = vunpack.c.h.b16 %v1798
        %v1957 = vunpack.c.l.b16 %v1799
        %v1958 = vunpack.c.l.b16 %v1800
        %v1959 = vunpack.c.h.b16 %v1800
        %v1960 = vunpack.c.l.b16 %v1801
        %v1961 = vunpack.c.h.b16 %v1801
        %v1962 = vunpack.c.l.b16 %v1802
        %v1963 = vunpack.c.h.b16 %v1802
        %v1964 = vunpack.c.l.b16 %v1803
        %v1965 = vunpack.c.l.b16 %v1804
        %v1966 = vunpack.c.h.b16 %v1804
        %v1967 = vunpack.c.l.b16 %v1805
        %v1968 = vunpack.c.h.b16 %v1805
        %v1969 = vunpack.c.l.b16 %v1806
        %v1970 = vunpack.c.h.b16 %v1806
        %v1971 = vunpack.c.l.b16 %v1807
        %v1972 = vunpack.c.l.b16 %v1808
        %v1973 = vunpack.c.h.b16 %v1808
        %v1974 = vunpack.c.l.b16 %v1809
        %v1975 = vunpack.c.h.b16 %v1809
        %v1976 = vunpack.c.l.b16 %v1810
        %v1977 = vunpack.c.h.b16 %v1810
        %v1978 = vunpack.c.l.b16 %v1811
        %v1979 = vunpack.c.l.b16 %v1812
        %v1980 = vunpack.c.h.b16 %v1812
        %v1981 = vunpack.c.l.b16 %v1813
        %v1982 = vunpack.c.h.b16 %v1813
        %v1983 = vunpack.c.l.b16 %v1814
        %v1984 = vunpack.c.h.b16 %v1814
        %v1985 = vunpack.c.l.b16 %v1815
        %v1986 = vunpack.c.l.b16 %v1816
        %v1987 = vunpack.c.h.b16 %v1816
        %v1988 = vunpack.c.l.b16 %v1817
        %v1989 = vunpack.c.h.b16 %v1817
        %v1990 = vunpack.c.l.b16 %v1818
        %v1991 = vunpack.c.h.b16 %v1818
        %v1992 = vunpack.c.l.b16 %v1819
        %v1993 = vunpack.c.l.b16 %v1820
        %v1994 = vunpack.c.h.b16 %v1820
        %v1995 = vunpack.c.l.b16 %v1821
        %v1996 = vunpack.c.h.b16 %v1821
        %v1997 = vunpack.c.l.b16 %v1822
        %v1998 = vunpack.c.h.b16 %v1822
        %v1999 = vunpack.c.l.b16 %v1823
        %v2000 = vunpack.c.l.b16 %v1824
        %v2001 = vunpack.c.h.b16 %v1824
        %v2002 = vunpack.c.l.b16 %v1825
        %v2003 = vunpack.c.h.b16 %v1825
        %v2004 = vunpack.c.l.b16 %v1826
        %v2005 = vunpack.c.h.b16 %v1826
        %v2006 = vunpack.c.l.b16 %v1827
        %v2007 = vunpack.c.l.b16 %v1828
        %v2008 = vunpack.c.h.b16 %v1828
        %v2009 = vunpack.c.l.b16 %v1829
        %v2010 = vunpack.c.h.b16 %v1829
        %v2011 = vunpack.c.l.b16 %v1830
        %v2012 = vunpack.c.h.b16 %v1830
        %v2013 = vunpack.c.l.b16 %v1831
        %v2014 = vunpack.c.l.b16 %v1832
        %v2015 = vunpack.c.h.b16 %v1832
        %v2016 = vunpack.c.l.b16 %v1833
        %v2017 = vunpack.c.h.b16 %v1833
        %v2018 = vunpack.c.l.b16 %v1834
        %v2019 = vunpack.c.h.b16 %v1834
        %v2020 = vunpack.c.l.b16 %v1835
        %v2021 = vunpack.c.l.b16 %v1836
        %v2022 = vunpack.c.h.b16 %v1836
        %v2023 = vunpack.c.l.b16 %v1837
        %v2024 = vunpack.c.h.b16 %v1837
        %v2025 = vunpack.c.l.b16 %v1838
        %v2026 = vunpack.c.h.b16 %v1838
        %v2027 = vunpack.c.l.b16 %v1839
        %v2028 = vunpack.c.l.b16 %v1840
        %v2029 = vunpack.c.h.b16 %v1840
        %v2030 = vunpack.c.l.b16 %v1841
        %v2031 = vunpack.c.h.b16 %v1841
        %v2032 = vunpack.c.l.b16 %v1842
        %v2033 = vunpack.c.h.b16 %v1842
        %v2034 = vunpack.c.l.b16 %v1843
        %v2035 = vunpack.c.l.b16 %v1844
        %v2036 = vunpack.c.h.b16 %v1844
        %v2037 = vunpack.c.l.b16 %v1845
        %v2038 = vunpack.c.h.b16 %v1845
        %v2039 = vunpack.c.l.b16 %v1846
        %v2040 = vunpack.c.h.b16 %v1846
        %v2041 = vunpack.c.l.b16 %v1847
        %v2042 = vpack.c.b16 %v1937, %v1930
        %v2043 = vpack.c.b16 %v1938, %v1931
        %v2044 = vpack.c.b16 %v1939, %v1932
        %v2045 = vpack.c.b16 %v1940, %v1933
        %v2046 = vpack.c.b16 %v1941, %v1934
        %v2047 = vpack.c.b16 %v1942, %v1935
        %v2048 = vpack.c.b16 %v1943, %v1936
        %v2049 = vpack.c.b16 %v1951, %v1944
        %v2050 = vpack.c.b16 %v1952, %v1945
        %v2051 = vpack.c.b16 %v1953, %v1946
        %v2052 = vpack.c.b16 %v1954, %v1947
        %v2053 = vpack.c.b16 %v1955, %v1948
        %v2054 = vpack.c.b16 %v1956, %v1949
        %v2055 = vpack.c.b16 %v1957, %v1950
        %v2056 = vpack.c.b16 %v1965, %v1958
        %v2057 = vpack.c.b16 %v1966, %v1959
        %v2058 = vpack.c.b16 %v1967, %v1960
        %v2059 = vpack.c.b16 %v1968, %v1961
        %v2060 = vpack.c.b16 %v1969, %v1962
        %v2061 = vpack.c.b16 %v1970, %v1963
        %v2062 = vpack.c.b16 %v1971, %v1964
        %v2063 = vpack.c.b16 %v1979, %v1972
        %v2064 = vpack.c.b16 %v1980, %v1973
        %v2065 = vpack.c.b16 %v1981, %v1974
        %v2066 = vpack.c.b16 %v1982, %v1975
        %v2067 = vpack.c.b16 %v1983, %v1976
        %v2068 = vpack.c.b16 %v1984, %v1977
        %v2069 = vpack.c.b16 %v1985, %v1978
        %v2070 = vpack.c.b16 %v1993, %v1986
        %v2071 = vpack.c.b16 %v1994, %v1987
        %v2072 = vpack.c.b16 %v1995, %v1988
        %v2073 = vpack.c.b16 %v1996, %v1989
        %v2074 = vpack.c.b16 %v1997, %v1990
        %v2075 = vpack.c.b16 %v1998, %v1991
        %v2076 = vpack.c.b16 %v1999, %v1992
        %v2077 = vpack.c.b16 %v2007, %v2000
        %v2078 = vpack.c.b16 %v2008, %v2001
        %v2079 = vpack.c.b16 %v2009, %v2002
        %v2080 = vpack.c.b16 %v2010, %v2003
        %v2081 = vpack.c.b16 %v2011, %v2004
        %v2082 = vpack.c.b16 %v2012, %v2005
        %v2083 = vpack.c.b16 %v2013, %v2006
        %v2084 = vpack.c.b16 %v2021, %v2014
        %v2085 = vpack.c.b16 %v2022, %v2015
        %v2086 = vpack.c.b16 %v2023, %v2016
        %v2087 = vpack.c.b16 %v2024, %v2017
        %v2088 = vpack.c.b16 %v2025, %v2018
        %v2089 = vpack.c.b16 %v2026, %v2019
        %v2090 = vpack.c.b16 %v2027, %v2020
        %v2091 = vpack.c.b16 %v2035, %v2028
        %v2092 = vpack.c.b16 %v2036, %v2029
        %v2093 = vpack.c.b16 %v2037, %v2030
        %v2094 = vpack.c.b16 %v2038, %v2031
        %v2095 = vpack.c.b16 %v2039, %v2032
        %v2096 = vpack.c.b16 %v2040, %v2033
        %v2097 = vpack.c.b16 %v2041, %v2034
        %2154 = vmatpush.bf16.msra.mxu0 %v2091
        %2155 = vmatpush.bf16.msra.mxu0 %v2084
        %2156 = vmatpush.bf16.msra.mxu0 %v2077
        %2157 = vmatpush.bf16.msra.mxu0 %v2070
        %2158 = vmatpush.bf16.msra.mxu0 %v2063
        %2159 = vmatpush.bf16.msra.mxu0 %v2056
        %2160 = vmatpush.bf16.msra.mxu0 %v2049
        %2161 = vmatpush.bf16.msra.mxu0 %v2042
        %2162 = vmatmul.bf16.gmra.mxu0 %v1849
        %v2163 = vpop.f32.mrf.mxu0
        %v2164 = vadd.f32 %v1852, %v2163
        %v2165 = vpop.f32.mrf.mxu0
        %v2166 = vadd.f32 %v1852, %v2165
        %2167 = vmatmul.bf16.gmra.mxu0 %v1850
        %v2168 = vpop.f32.mrf.mxu0
        %v2169 = vadd.f32 %v1852, %v2168
        %v2170 = vpop.f32.mrf.mxu0
        %v2171 = vadd.f32 %v1852, %v2170
        %2172 = vdwg.mxu0
        %2173 = vmatpush.bf16.msra.mxu0 %v2092
        %2174 = vmatpush.bf16.msra.mxu0 %v2085
        %2175 = vmatpush.bf16.msra.mxu0 %v2078
        %2176 = vmatpush.bf16.msra.mxu0 %v2071
        %2177 = vmatpush.bf16.msra.mxu0 %v2064
        %2178 = vmatpush.bf16.msra.mxu0 %v2057
        %2179 = vmatpush.bf16.msra.mxu0 %v2050
        %2180 = vmatpush.bf16.msra.mxu0 %v2043
        %2181 = vmatmul.bf16.gmra.mxu0 %v1849
        %v2182 = vpop.f32.mrf.mxu0
        %v2183 = vadd.f32 %v1853, %v2182
        %v2184 = vpop.f32.mrf.mxu0
        %v2185 = vadd.f32 %v1853, %v2184
        %2186 = vmatmul.bf16.gmra.mxu0 %v1850
        %v2187 = vpop.f32.mrf.mxu0
        %v2188 = vadd.f32 %v1853, %v2187
        %v2189 = vpop.f32.mrf.mxu0
        %v2190 = vadd.f32 %v1853, %v2189
        %2191 = vdwg.mxu0
        %2192 = vmatpush.bf16.msra.mxu0 %v2093
        %2193 = vmatpush.bf16.msra.mxu0 %v2086
        %2194 = vmatpush.bf16.msra.mxu0 %v2079
        %2195 = vmatpush.bf16.msra.mxu0 %v2072
        %2196 = vmatpush.bf16.msra.mxu0 %v2065
        %2197 = vmatpush.bf16.msra.mxu0 %v2058
        %2198 = vmatpush.bf16.msra.mxu0 %v2051
        %2199 = vmatpush.bf16.msra.mxu0 %v2044
        %2200 = vmatmul.bf16.gmra.mxu0 %v1849
        %v2201 = vpop.f32.mrf.mxu0
        %v2202 = vadd.f32 %v1854, %v2201
        %v2203 = vpop.f32.mrf.mxu0
        %v2204 = vadd.f32 %v1854, %v2203
        %2205 = vmatmul.bf16.gmra.mxu0 %v1850
        %v2206 = vpop.f32.mrf.mxu0
        %v2207 = vadd.f32 %v1854, %v2206
        %v2208 = vpop.f32.mrf.mxu0
        %v2209 = vadd.f32 %v1854, %v2208
        %2210 = vdwg.mxu0
        %2211 = vmatpush.bf16.msra.mxu0 %v2094
        %2212 = vmatpush.bf16.msra.mxu0 %v2087
        %2213 = vmatpush.bf16.msra.mxu0 %v2080
        %2214 = vmatpush.bf16.msra.mxu0 %v2073
        %2215 = vmatpush.bf16.msra.mxu0 %v2066
        %2216 = vmatpush.bf16.msra.mxu0 %v2059
        %2217 = vmatpush.bf16.msra.mxu0 %v2052
        %2218 = vmatpush.bf16.msra.mxu0 %v2045
        %2219 = vmatmul.bf16.gmra.mxu0 %v1849
        %v2220 = vpop.f32.mrf.mxu0
        %v2221 = vadd.f32 %v1855, %v2220
        %v2222 = vpop.f32.mrf.mxu0
        %v2223 = vadd.f32 %v1855, %v2222
        %2224 = vmatmul.bf16.gmra.mxu0 %v1850
        %v2225 = vpop.f32.mrf.mxu0
        %v2226 = vadd.f32 %v1855, %v2225
        %v2227 = vpop.f32.mrf.mxu0
        %v2228 = vadd.f32 %v1855, %v2227
        %2229 = vdwg.mxu0
        %2230 = vmatpush.bf16.msra.mxu0 %v2095
        %2231 = vmatpush.bf16.msra.mxu0 %v2088
        %2232 = vmatpush.bf16.msra.mxu0 %v2081
        %2233 = vmatpush.bf16.msra.mxu0 %v2074
        %2234 = vmatpush.bf16.msra.mxu0 %v2067
        %2235 = vmatpush.bf16.msra.mxu0 %v2060
        %2236 = vmatpush.bf16.msra.mxu0 %v2053
        %2237 = vmatpush.bf16.msra.mxu0 %v2046
        %2238 = vmatmul.bf16.gmra.mxu0 %v1849
        %v2239 = vpop.f32.mrf.mxu0
        %v2240 = vadd.f32 %v1856, %v2239
        %v2241 = vpop.f32.mrf.mxu0
        %v2242 = vadd.f32 %v1856, %v2241
        %2243 = vmatmul.bf16.gmra.mxu0 %v1850
        %v2244 = vpop.f32.mrf.mxu0
        %v2245 = vadd.f32 %v1856, %v2244
        %v2246 = vpop.f32.mrf.mxu0
        %v2247 = vadd.f32 %v1856, %v2246
        %2248 = vdwg.mxu0
        %2249 = vmatpush.bf16.msra.mxu0 %v2096
        %2250 = vmatpush.bf16.msra.mxu0 %v2089
        %2251 = vmatpush.bf16.msra.mxu0 %v2082
        %2252 = vmatpush.bf16.msra.mxu0 %v2075
        %2253 = vmatpush.bf16.msra.mxu0 %v2068
        %2254 = vmatpush.bf16.msra.mxu0 %v2061
        %2255 = vmatpush.bf16.msra.mxu0 %v2054
        %2256 = vmatpush.bf16.msra.mxu0 %v2047
        %2257 = vmatmul.bf16.gmra.mxu0 %v1849
        %v2258 = vpop.f32.mrf.mxu0
        %v2259 = vadd.f32 %v1857, %v2258
        %v2260 = vpop.f32.mrf.mxu0
        %v2261 = vadd.f32 %v1857, %v2260
        %2262 = vmatmul.bf16.gmra.mxu0 %v1850
        %v2263 = vpop.f32.mrf.mxu0
        %v2264 = vadd.f32 %v1857, %v2263
        %v2265 = vpop.f32.mrf.mxu0
        %v2266 = vadd.f32 %v1857, %v2265
        %2267 = vdwg.mxu0
        %2268 = vmatpush.bf16.msra.mxu0 %v2097
        %2269 = vmatpush.bf16.msra.mxu0 %v2090
        %2270 = vmatpush.bf16.msra.mxu0 %v2083
        %2271 = vmatpush.bf16.msra.mxu0 %v2076
        %2272 = vmatpush.bf16.msra.mxu0 %v2069
        %2273 = vmatpush.bf16.msra.mxu0 %v2062
        %2274 = vmatpush.bf16.msra.mxu0 %v2055
        %2275 = vmatpush.bf16.msra.mxu0 %v2048
        %2276 = vmatmul.bf16.gmra.mxu0 %v1849
        %v2277 = vpop.f32.mrf.mxu0
        %v2278 = vadd.f32 %v1858, %v2277
        %v2279 = vpop.f32.mrf.mxu0
        %v2280 = vadd.f32 %v1858, %v2279
        %2281 = vmatmul.bf16.gmra.mxu0 %v1850
        %v2282 = vpop.f32.mrf.mxu0
        %v2283 = vadd.f32 %v1858, %v2282
        %v2284 = vpop.f32.mrf.mxu0
        %v2285 = vadd.f32 %v1858, %v2284
        %2286 = vdwg.mxu0
        %v2287 = vsub.f32 0.0, %v2164
        %v2288 = vsub.f32 0.0, %v2183
        %v2289 = vsub.f32 0.0, %v2202
        %v2290 = vsub.f32 0.0, %v2221
        %v2291 = vsub.f32 0.0, %v2240
        %v2292 = vsub.f32 0.0, %v2259
        %v2293 = vsub.f32 0.0, %v2278
        %v2294 = vsub.f32 0.0, %v2166
        %v2295 = vsub.f32 0.0, %v2185
        %v2296 = vsub.f32 0.0, %v2204
        %v2297 = vsub.f32 0.0, %v2223
        %v2298 = vsub.f32 0.0, %v2242
        %v2299 = vsub.f32 0.0, %v2261
        %v2300 = vsub.f32 0.0, %v2280
        %v2301 = vsub.f32 0.0, %v2169
        %v2302 = vsub.f32 0.0, %v2188
        %v2303 = vsub.f32 0.0, %v2207
        %v2304 = vsub.f32 0.0, %v2226
        %v2305 = vsub.f32 0.0, %v2245
        %v2306 = vsub.f32 0.0, %v2264
        %v2307 = vsub.f32 0.0, %v2283
        %v2308 = vsub.f32 0.0, %v2171
        %v2309 = vsub.f32 0.0, %v2190
        %v2310 = vsub.f32 0.0, %v2209
        %v2311 = vsub.f32 0.0, %v2228
        %v2312 = vsub.f32 0.0, %v2247
        %v2313 = vsub.f32 0.0, %v2266
        %v2314 = vsub.f32 0.0, %v2285
        %v2315 = vmul.f32 %v2287, 1.442695
        %v2316 = vpow.pop %v2315
        %v2317 = vmul.f32 %v2288, 1.442695
        %v2318 = vpow.pop %v2317
        %v2319 = vmul.f32 %v2289, 1.442695
        %v2320 = vpow.pop %v2319
        %v2321 = vmul.f32 %v2290, 1.442695
        %v2322 = vpow.pop %v2321
        %v2323 = vmul.f32 %v2291, 1.442695
        %v2324 = vpow.pop %v2323
        %v2325 = vmul.f32 %v2292, 1.442695
        %v2326 = vpow.pop %v2325
        %v2327 = vmul.f32 %v2293, 1.442695
        %v2328 = vpow.pop %v2327
        %v2329 = vmul.f32 %v2294, 1.442695
        %v2330 = vpow.pop %v2329
        %v2331 = vmul.f32 %v2295, 1.442695
        %v2332 = vpow.pop %v2331
        %v2333 = vmul.f32 %v2296, 1.442695
        %v2334 = vpow.pop %v2333
        %v2335 = vmul.f32 %v2297, 1.442695
        %v2336 = vpow.pop %v2335
        %v2337 = vmul.f32 %v2298, 1.442695
        %v2338 = vpow.pop %v2337
        %v2339 = vmul.f32 %v2299, 1.442695
        %v2340 = vpow.pop %v2339
        %v2341 = vmul.f32 %v2300, 1.442695
        %v2342 = vpow.pop %v2341
        %v2343 = vmul.f32 %v2301, 1.442695
        %v2344 = vpow.pop %v2343
        %v2345 = vmul.f32 %v2302, 1.442695
        %v2346 = vpow.pop %v2345
        %v2347 = vmul.f32 %v2303, 1.442695
        %v2348 = vpow.pop %v2347
        %v2349 = vmul.f32 %v2304, 1.442695
        %v2350 = vpow.pop %v2349
        %v2351 = vmul.f32 %v2305, 1.442695
        %v2352 = vpow.pop %v2351
        %v2353 = vmul.f32 %v2306, 1.442695
        %v2354 = vpow.pop %v2353
        %v2355 = vmul.f32 %v2307, 1.442695
        %v2356 = vpow.pop %v2355
        %v2357 = vmul.f32 %v2308, 1.442695
        %v2358 = vpow.pop %v2357
        %v2359 = vmul.f32 %v2309, 1.442695
        %v2360 = vpow.pop %v2359
        %v2361 = vmul.f32 %v2310, 1.442695
        %v2362 = vpow.pop %v2361
        %v2363 = vmul.f32 %v2311, 1.442695
        %v2364 = vpow.pop %v2363
        %v2365 = vmul.f32 %v2312, 1.442695
        %v2366 = vpow.pop %v2365
        %v2367 = vmul.f32 %v2313, 1.442695
        %v2368 = vpow.pop %v2367
        %v2369 = vmul.f32 %v2314, 1.442695
        %v2370 = vpow.pop %v2369
        %v2371 = vadd.f32 %v2316, 1.0
        %v2372 = vadd.f32 %v2318, 1.0
        %v2373 = vadd.f32 %v2320, 1.0
        %v2374 = vadd.f32 %v2322, 1.0
        %v2375 = vadd.f32 %v2324, 1.0
        %v2376 = vadd.f32 %v2326, 1.0
        %v2377 = vadd.f32 %v2328, 1.0
        %v2378 = vadd.f32 %v2330, 1.0
        %v2379 = vadd.f32 %v2332, 1.0
        %v2380 = vadd.f32 %v2334, 1.0
        %v2381 = vadd.f32 %v2336, 1.0
        %v2382 = vadd.f32 %v2338, 1.0
        %v2383 = vadd.f32 %v2340, 1.0
        %v2384 = vadd.f32 %v2342, 1.0
        %v2385 = vadd.f32 %v2344, 1.0
        %v2386 = vadd.f32 %v2346, 1.0
        %v2387 = vadd.f32 %v2348, 1.0
        %v2388 = vadd.f32 %v2350, 1.0
        %v2389 = vadd.f32 %v2352, 1.0
        %v2390 = vadd.f32 %v2354, 1.0
        %v2391 = vadd.f32 %v2356, 1.0
        %v2392 = vadd.f32 %v2358, 1.0
        %v2393 = vadd.f32 %v2360, 1.0
        %v2394 = vadd.f32 %v2362, 1.0
        %v2395 = vadd.f32 %v2364, 1.0
        %v2396 = vadd.f32 %v2366, 1.0
        %v2397 = vadd.f32 %v2368, 1.0
        %v2398 = vadd.f32 %v2370, 1.0
        %v2399 = vrcp.pop %v2371
        %v2400 = vrcp.pop %v2372
        %v2401 = vrcp.pop %v2373
        %v2402 = vrcp.pop %v2374
        %v2403 = vrcp.pop %v2375
        %v2404 = vrcp.pop %v2376
        %v2405 = vrcp.pop %v2377
        %v2406 = vrcp.pop %v2378
        %v2407 = vrcp.pop %v2379
        %v2408 = vrcp.pop %v2380
        %v2409 = vrcp.pop %v2381
        %v2410 = vrcp.pop %v2382
        %v2411 = vrcp.pop %v2383
        %v2412 = vrcp.pop %v2384
        %v2413 = vrcp.pop %v2385
        %v2414 = vrcp.pop %v2386
        %v2415 = vrcp.pop %v2387
        %v2416 = vrcp.pop %v2388
        %v2417 = vrcp.pop %v2389
        %v2418 = vrcp.pop %v2390
        %v2419 = vrcp.pop %v2391
        %v2420 = vrcp.pop %v2392
        %v2421 = vrcp.pop %v2393
        %v2422 = vrcp.pop %v2394
        %v2423 = vrcp.pop %v2395
        %v2424 = vrcp.pop %v2396
        %v2425 = vrcp.pop %v2397
        %v2426 = vrcp.pop %v2398
        %2427 = vst [vmem:[%s594] sm:$0xff] %v2399
        %2428 = vst [vmem:[%s594 + $0x8] sm:$0xff] %v2400
        %2429 = vst [vmem:[%s594 + $0x10] sm:$0xff] %v2401
        %2430 = vst [vmem:[%s594 + $0x18] sm:$0xff] %v2402
        %2431 = vst [vmem:[%s594 + $0x20] sm:$0xff] %v2403
        %2432 = vst [vmem:[%s594 + $0x28] sm:$0xff] %v2404
        %2433 = vst.msk [vmem:[%s594 + $0x30] sm:$0xff] %vm1086, %v2405
        %2434 = vst [vmem:[%s594 + $0x38] sm:$0xff] %v2406
        %2435 = vst [vmem:[%s594 + $0x40] sm:$0xff] %v2407
        %2436 = vst [vmem:[%s594 + $0x48] sm:$0xff] %v2408
        %2437 = vst [vmem:[%s594 + $0x50] sm:$0xff] %v2409
        %2438 = vst [vmem:[%s594 + $0x58] sm:$0xff] %v2410
        %2439 = vst [vmem:[%s594 + $0x60] sm:$0xff] %v2411
        %2440 = vst.msk [vmem:[%s594 + $0x68] sm:$0xff] %vm1086, %v2412
        %2441 = vst [vmem:[%s594 + $0x70] sm:$0xff] %v2413
        %2442 = vst [vmem:[%s594 + $0x78] sm:$0xff] %v2414
        %2443 = vst [vmem:[%s594 + $0x80] sm:$0xff] %v2415
        %2444 = vst [vmem:[%s594 + $0x88] sm:$0xff] %v2416
        %2445 = vst [vmem:[%s594 + $0x90] sm:$0xff] %v2417
        %2446 = vst [vmem:[%s594 + $0x98] sm:$0xff] %v2418
        %2447 = vst.msk [vmem:[%s594 + $0xa0] sm:$0xff] %vm1086, %v2419
        %2448 = vst [vmem:[%s594 + $0xa8] sm:$0xff] %v2420
        %2449 = vst [vmem:[%s594 + $0xb0] sm:$0xff] %v2421
        %2450 = vst [vmem:[%s594 + $0xb8] sm:$0xff] %v2422
        %2451 = vst [vmem:[%s594 + $0xc0] sm:$0xff] %v2423
        %2452 = vst [vmem:[%s594 + $0xc8] sm:$0xff] %v2424
        %2453 = vst [vmem:[%s594 + $0xd0] sm:$0xff] %v2425
        %2454 = vst.msk [vmem:[%s594 + $0xd8] sm:$0xff] %vm1086, %v2426
        %s2455 = sand.u32 %s403, 1
        %s2456 = scalar_lea.sflag [#allocation4], %s2455
        %s2457 = sand.u32 %s403, 1
        %s2458 = smul.addr %s2457, 224
        %s2459 = scalar_lea.vmem [#allocation8], %s2458
        // Predicated region
        $region101: #{tpu_custom_call.1} parent=87 // pred_check
          %p2460 = pneg %p413
        $region102: #{tpu_custom_call.1} parent=87 // pred_check_branch
          %2462 = sbr.rel (%p2460) target = $region104
        $region103: #{tpu_custom_call.1} parent=87 // pred_region
          %s2463 = smul.u32 4, %s33
          %2465 = vsyncadd %s2456, 0
          %s2466 = smul.addr %s2463, 7
          %s2467 = smul.addr %s2466, 8
          %s2468 = scalar_lea.hbm %s17, %s2467
          %s2469 = sshll.u32 %s2459, 4
          %s2470 = int_to_ptr.vmem [resolvable:$true] %s2469
          %s2471 = sshll.u32 %s2468, 4
          %s2472 = int_to_ptr.hbm [resolvable:$true] %s2471
          %2477 = dma.vmem_to_hbm [thread:$0]  %s2470, 3584, %s2472, %s2456, 896, 896, 56
        $region104: #{tpu_custom_call.1} parent=87 // pred_fallthru
          _
      $region88: #{tpu_custom_call.1} parent=5 // pred_fallthru
        _
      %p2478 = scmp.le.s32.totalorder 2, %s28
      // Predicated region
      $region105: #{tpu_custom_call.1} parent=5 // pred_check
        %p2479 = pneg %p2478
      $region106: #{tpu_custom_call.1} parent=5 // pred_check_branch
        %2481 = sbr.rel (%p2479) target = $region108
      $region107: #{tpu_custom_call.1} parent=5 // pred_region
        %s2482 = ssub.s32 %s28, 2
        // Predicated region
        $region109: #{tpu_custom_call.1} parent=107 // pred_check
          %p2483 = pneg %p419
        $region110: #{tpu_custom_call.1} parent=107 // pred_check_branch
          %2485 = sbr.rel (%p2483) target = $region112
        $region111: #{tpu_custom_call.1} parent=107 // pred_region
          %s2486 = sand.u32 %s404, 1
          %s2487 = scalar_lea.sflag [#allocation4], %s2486
          %s2488 = sand.u32 %s404, 1
          %s2489 = smul.addr %s2488, 224
          %s2490 = scalar_lea.vmem [#allocation8], %s2489
          %2492 = dma.done %s2487, 3584
        $region112: #{tpu_custom_call.1} parent=107 // pred_fallthru
          _
      $region108: #{tpu_custom_call.1} parent=5 // pred_fallthru
        _
    $region6: #{tpu_custom_call.1} parent=1 // loop_footer
      %s32 = sadd.s32 1, %s28
    $region7: #{tpu_custom_call.1} parent=1 // loop_footer_branch
      %27 = sbr.rel target = $region3
    $region8: #{tpu_custom_call.1} parent=1 // loop_exit
      _
    %2493 = vsyncpa [#allocation3], 1
    %s2494 = scalar_lea.sflag [#allocation3], 1
    %2495 = vsyncpa %s2494, 1
    %2496 = vsyncpa [#allocation6], 1
    %2497 = vsyncpa [#allocation4], 1
    %s2498 = scalar_lea.sflag [#allocation4], 1
    %2499 = vsyncpa %s2498, 1

</llo_original>
